<compile_context>
chip_gen: v7x
topology: tpu7x:2x2x1
jax: 0.10.0
libtpu: 0.0.40
codegen_flags: <defaults>
</compile_context>

<pallas_src>
import functools

import jax
import jax.numpy as jnp
from jax import lax
from jax.experimental import pallas as pl
from jax.experimental.pallas import tpu as pltpu


# ----------------------------- kernel ---------------------------------------


def _softshrink(v, lambd):
    return jnp.where(v > lambd, v - lambd,
                     jnp.where(v < -lambd, v + lambd, jnp.zeros_like(v)))


def _mm(w, v):
    # w: (Cin, Cout), v: (Cin, TM)  ->  (Cout, TM)   (contract over channels)
    return lax.dot_general(w, v, dimension_numbers=(((0,), (0,)), ((), ())),
                           preferred_element_type=jnp.float32)


def _complex_mlp(vr, vi, wAr, wAi, bAr, bAi, wBr, wBi, bBr, bBi, lambd):
    # stage A: complex linear + bias + ReLU ; stage B: complex linear + bias + softshrink
    o1r = jnp.maximum(_mm(wAr, vr) - _mm(wAi, vi) + bAr, 0.0)
    o1i = jnp.maximum(_mm(wAr, vi) + _mm(wAi, vr) + bAi, 0.0)
    o2r = _mm(wBr, o1r) - _mm(wBi, o1i) + bBr
    o2i = _mm(wBr, o1i) + _mm(wBi, o1r) + bBi
    return _softshrink(o2r, lambd), _softshrink(o2i, lambd)


def _sgn_kernel(x_ref, g_ref,
                w1_ref, b1_ref, w2_ref, b2_ref,
                w3_ref, b3_ref, w4_ref, b4_ref,
                out_ref, *, lambd):
    f32 = jnp.float32
    xr = x_ref[0, 0].astype(f32)          # (C, TM)
    xi = x_ref[1, 0].astype(f32)
    gr = g_ref[0, 0].astype(f32)
    gi = g_ref[1, 0].astype(f32)

    # x-path: w1/b1 -> relu -> w2/b2 -> softshrink
    x2r, x2i = _complex_mlp(xr, xi,
                            w1_ref[0], w1_ref[1], b1_ref[0], b1_ref[1],
                            w2_ref[0], w2_ref[1], b2_ref[0], b2_ref[1], lambd)
    # branch-path: w3/b3 -> relu -> w4/b4 -> softshrink
    g2r, g2i = _complex_mlp(gr, gi,
                            w3_ref[0], w3_ref[1], b3_ref[0], b3_ref[1],
                            w4_ref[0], w4_ref[1], b4_ref[0], b4_ref[1], lambd)

    # complex gating:  x_freq * branch_freq
    out_ref[0, 0] = x2r * g2r - x2i * g2i
    out_ref[1, 0] = x2r * g2i + x2i * g2r


# ----------------------------- wrapper ---------------------------------------


def _pad_to(n, m):
    return ((n + m - 1) // m) * m


def _block_diag(w):
    # (2, K, a, b) -> (2, K*a, K*b) block-diagonal (exact: added terms are *0)
    two, K, a, b = w.shape
    eye = jnp.eye(K, dtype=w.dtype)
    wbd = jnp.einsum('rkio,kl->rkilo', w, eye)      # (2, K, a, K, b)
    return wbd.reshape(two, K * a, K * b)


def _choose_lane_tile(M, rows):
    # VMEM budget per grid step (conservative so it also fits v7x's 64 MiB /
    # 32 MiB-scoped VMEM): 3 streamed operands (x, branch, out) x 2 pipeline
    # buffers x (re,im) rows + ~8 live f32 intermediates of the two MLPs.
    budget = 12 * 1024 * 1024
    bytes_per_lane = (3 * 2 * 2 + 8) * rows * 4
    cap = max(128, (budget // bytes_per_lane) // 128 * 128)
    target = min(4096, cap)
    if M <= target:
        return _pad_to(M, 128)
    return target


def spectral_gating_forward(x, branch, params, num_blocks=8,
                            sparsity_threshold=0.01,
                            stream_dtype=jnp.float32):
    """Forward pass of SpectralGatingNetwork: returns irfft2(MLP(x_f)*MLP(branch_f)) + x + branch."""
    B, C, H, W = x.shape
    assert C % num_blocks == 0
    bs = C // num_blocks
    bsf = params['w1'].shape[-1]              # block_size * hidden_size_factor
    Cf = num_blocks * bsf
    out_dtype = x.dtype

    # --- FFT glue (no Pallas FFT primitive) ---------------------------------
    xf = jnp.fft.rfft2(x.astype(jnp.float32), axes=(2, 3), norm='ortho')
    gf = jnp.fft.rfft2(branch.astype(jnp.float32), axes=(2, 3), norm='ortho')
    Wf = xf.shape[-1]
    M = H * Wf

    TM = _choose_lane_tile(M, max(C, Cf))
    Mp = _pad_to(M, TM)

    def pack(z):
        # (B, C, H, Wf) complex -> (2, B, C, Mp) real; contiguous reshape only,
        # the stack/pad fuses with the unavoidable real/imag extraction pass.
        zr = jnp.real(z).reshape(B, C, M)
        zi = jnp.imag(z).reshape(B, C, M)
        s = jnp.stack([zr, zi], axis=0)
        if Mp != M:
            s = jnp.pad(s, ((0, 0), (0, 0), (0, 0), (0, Mp - M)))
        return s.astype(stream_dtype)

    xs = pack(xf)
    gs = pack(gf)

    # --- block-diagonal weights / flat biases (exact reformulation) ---------
    w1bd = _block_diag(params['w1'].astype(jnp.float32))   # (2, C,  Cf)
    w2bd = _block_diag(params['w2'].astype(jnp.float32))   # (2, Cf, C)
    w3bd = _block_diag(params['w3'].astype(jnp.float32))
    w4bd = _block_diag(params['w4'].astype(jnp.float32))
    b1 = params['b1'].astype(jnp.float32).reshape(2, Cf, 1)
    b2 = params['b2'].astype(jnp.float32).reshape(2, C, 1)
    b3 = params['b3'].astype(jnp.float32).reshape(2, Cf, 1)
    b4 = params['b4'].astype(jnp.float32).reshape(2, C, 1)

    grid = (B, Mp // TM)
    data_spec = pl.BlockSpec((2, 1, C, TM), lambda b, m: (0, b, 0, m))

    def const_spec(shape):
        # full-array block, constant index -> stays resident across grid steps
        return pl.BlockSpec(shape, lambda b, m: (0,) * len(shape))

    kernel = functools.partial(_sgn_kernel, lambd=sparsity_threshold)
    out = pl.pallas_call(
        kernel,
        out_shape=jax.ShapeDtypeStruct((2, B, C, Mp), jnp.float32),
        grid_spec=pltpu.PrefetchScalarGridSpec(
            num_scalar_prefetch=0,
            grid=grid,
            in_specs=[data_spec, data_spec,
                      const_spec(w1bd.shape), const_spec(b1.shape),
                      const_spec(w2bd.shape), const_spec(b2.shape),
                      const_spec(w3bd.shape), const_spec(b3.shape),
                      const_spec(w4bd.shape), const_spec(b4.shape)],
            out_specs=data_spec),
        compiler_params=pltpu.CompilerParams(
            dimension_semantics=("parallel", "parallel"),
            vmem_limit_bytes=32 * 1024 * 1024),
    )(xs, gs, w1bd, b1, w2bd, b2, w3bd, b3, w4bd, b4)

    # --- inverse FFT + residual adds ----------------------------------------
    outr = out[0, :, :, :M].reshape(B, C, H, Wf)
    outi = out[1, :, :, :M].reshape(B, C, H, Wf)
    prod = lax.complex(outr, outi)
    y = jnp.fft.irfft2(prod, s=(H, W), axes=(2, 3), norm='ortho')
    # return x + bias + bias2 (bias = original x, bias2 = original branch);
    # the standalone irfft2(branch) in the reference is dead code (unused).
    return y.astype(out_dtype) + x + branch


# ----------------------------- pure-JAX reference ----------------------------


def _reference(x, branch, params, num_blocks, lambd):
    B, C, H, W = x.shape
    bs = C // num_blocks
    dt = x.dtype
    hp = jax.lax.Precision.HIGHEST

    def path(z, wA, bA, wB, bB):
        zr = jnp.real(z).reshape(B, num_blocks, bs, z.shape[-2], z.shape[-1])
        zi = jnp.imag(z).reshape(B, num_blocks, bs, z.shape[-2], z.shape[-1])
        e = lambda a, w: jnp.einsum('bkihw,kio->bkohw', a, w, precision=hp)
        o1r = jax.nn.relu(e(zr, wA[0]) - e(zi, wA[1]) + bA[0][None, :, :, None, None])
        o1i = jax.nn.relu(e(zi, wA[0]) + e(zr, wA[1]) + bA[1][None, :, :, None, None])
        o2r = e(o1r, wB[0]) - e(o1i, wB[1]) + bB[0][None, :, :, None, None]
        o2i = e(o1i, wB[0]) + e(o1r, wB[1]) + bB[1][None, :, :, None, None]
        o2r = _softshrink(o2r, lambd)
        o2i = _softshrink(o2i, lambd)
        return lax.complex(o2r, o2i).reshape(B, C, z.shape[-2], z.shape[-1])

    xf = jnp.fft.rfft2(x.astype(jnp.float32), axes=(2, 3), norm='ortho')
    gf = jnp.fft.rfft2(branch.astype(jnp.float32), axes=(2, 3), norm='ortho')
    xp = path(xf, params['w1'], params['b1'], params['w2'], params['b2'])
    gp = path(gf, params['w3'], params['b3'], params['w4'], params['b4'])
    y = jnp.fft.irfft2(xp * gp, s=(H, W), axes=(2, 3), norm='ortho')
    return y.astype(dt) + x + branch


# ----------------------------- demo -------------------------------------------


if __name__ == "__main__":
    key = jax.random.PRNGKey(0)
    B, C, H, W = 2, 16, 16, 16            # hidden_size = C = 16
    num_blocks = 8
    bs = C // num_blocks                  # block_size = 2
    factor = 1                            # hidden_size_factor
    scale = 0.02

    keys = jax.random.split(key, 10)
    params = {
        'w1': scale * jax.random.normal(keys[0], (2, num_blocks, bs, bs * factor), jnp.float32),
        'b1': scale * jax.random.normal(keys[1], (2, num_blocks, bs * factor), jnp.float32),
        'w2': scale * jax.random.normal(keys[2], (2, num_blocks, bs * factor, bs), jnp.float32),
        'b2': scale * jax.random.normal(keys[3], (2, num_blocks, bs), jnp.float32),
        'w3': scale * jax.random.normal(keys[4], (2, num_blocks, bs, bs * factor), jnp.float32),
        'b3': scale * jax.random.normal(keys[5], (2, num_blocks, bs * factor), jnp.float32),
        'w4': scale * jax.random.normal(keys[6], (2, num_blocks, bs * factor, bs), jnp.float32),
        'b4': scale * jax.random.normal(keys[7], (2, num_blocks, bs), jnp.float32),
    }
    x = jax.random.normal(keys[8], (B, C, H, W), jnp.float32)
    branch = jax.random.normal(keys[9], (B, C, H, W), jnp.float32)

    out = spectral_gating_forward(x, branch, params,
                                  num_blocks=num_blocks,
                                  sparsity_threshold=0.01)
    jax.block_until_ready(out)
    assert out.shape == (B, C, H, W) and out.dtype == x.dtype

    ref = _reference(x, branch, params, num_blocks, 0.01)
    jax.block_until_ready(ref)
    assert jnp.allclose(out, ref, atol=2e-3, rtol=2e-3), \
        float(jnp.max(jnp.abs(out - ref)))

    # TODO(synk): optional bf16 streaming (stream_dtype=jnp.bfloat16) for
    # v6e/v7x once validated against the f32 softshrink threshold sensitivity.
    print("KERNEL_OK")
</pallas_src>

<mosaic_0001>
module attributes {stable_mosaic.version = 11 : i64} {
  func.func @_sgn_kernel(%arg0: i32, %arg1: i32, %arg2: memref<2x1x16x256xf32, #tpu.memory_space<vmem>>, %arg3: memref<2x1x16x256xf32, #tpu.memory_space<vmem>>, %arg4: memref<2x16x16xf32, #tpu.memory_space<vmem>>, %arg5: memref<2x16x1xf32, #tpu.memory_space<vmem>>, %arg6: memref<2x16x16xf32, #tpu.memory_space<vmem>>, %arg7: memref<2x16x1xf32, #tpu.memory_space<vmem>>, %arg8: memref<2x16x16xf32, #tpu.memory_space<vmem>>, %arg9: memref<2x16x1xf32, #tpu.memory_space<vmem>>, %arg10: memref<2x16x16xf32, #tpu.memory_space<vmem>>, %arg11: memref<2x16x1xf32, #tpu.memory_space<vmem>>, %arg12: memref<2x1x16x256xf32, #tpu.memory_space<vmem>>) attributes {dimension_semantics = [#tpu.dimension_semantics<parallel>, #tpu.dimension_semantics<parallel>], iteration_bounds = array<i64: 2, 1>, scalar_prefetch = 0 : i64, scratch_operands = 0 : i64, tpu.core_type = #tpu.core_type<tc>, window_params = [{transform_indices = @transform_0, window_bounds = array<i64: 2, 1, 16, 256>}, {transform_indices = @transform_1, window_bounds = array<i64: 2, 1, 16, 256>}, {pipeline_mode = #tpu.pipeline_mode<synchronous>, transform_indices = @transform_2, window_bounds = array<i64: 2, 16, 16>}, {pipeline_mode = #tpu.pipeline_mode<synchronous>, transform_indices = @transform_3, window_bounds = array<i64: 2, 16, 1>}, {pipeline_mode = #tpu.pipeline_mode<synchronous>, transform_indices = @transform_4, window_bounds = array<i64: 2, 16, 16>}, {pipeline_mode = #tpu.pipeline_mode<synchronous>, transform_indices = @transform_5, window_bounds = array<i64: 2, 16, 1>}, {pipeline_mode = #tpu.pipeline_mode<synchronous>, transform_indices = @transform_6, window_bounds = array<i64: 2, 16, 16>}, {pipeline_mode = #tpu.pipeline_mode<synchronous>, transform_indices = @transform_7, window_bounds = array<i64: 2, 16, 1>}, {pipeline_mode = #tpu.pipeline_mode<synchronous>, transform_indices = @transform_8, window_bounds = array<i64: 2, 16, 16>}, {pipeline_mode = #tpu.pipeline_mode<synchronous>, transform_indices = @transform_9, window_bounds = array<i64: 2, 16, 1>}, {transform_indices = @transform_10, window_bounds = array<i64: 2, 1, 16, 256>}]} {
    %c0 = arith.constant 0 : index
    %c0_0 = arith.constant 0 : index
    %c0_1 = arith.constant 0 : index
    %c0_2 = arith.constant 0 : index
    %0 = vector.load %arg2[%c0, %c0_0, %c0_1, %c0_2] : memref<2x1x16x256xf32, #tpu.memory_space<vmem>>, vector<1x1x16x256xf32>
    %1 = vector.shape_cast %0 : vector<1x1x16x256xf32> to vector<16x256xf32>
    %c1 = arith.constant 1 : index
    %c0_3 = arith.constant 0 : index
    %c0_4 = arith.constant 0 : index
    %c0_5 = arith.constant 0 : index
    %2 = vector.load %arg2[%c1, %c0_3, %c0_4, %c0_5] : memref<2x1x16x256xf32, #tpu.memory_space<vmem>>, vector<1x1x16x256xf32>
    %3 = vector.shape_cast %2 : vector<1x1x16x256xf32> to vector<16x256xf32>
    %c0_6 = arith.constant 0 : index
    %c0_7 = arith.constant 0 : index
    %c0_8 = arith.constant 0 : index
    %c0_9 = arith.constant 0 : index
    %4 = vector.load %arg3[%c0_6, %c0_7, %c0_8, %c0_9] : memref<2x1x16x256xf32, #tpu.memory_space<vmem>>, vector<1x1x16x256xf32>
    %5 = vector.shape_cast %4 : vector<1x1x16x256xf32> to vector<16x256xf32>
    %c1_10 = arith.constant 1 : index
    %c0_11 = arith.constant 0 : index
    %c0_12 = arith.constant 0 : index
    %c0_13 = arith.constant 0 : index
    %6 = vector.load %arg3[%c1_10, %c0_11, %c0_12, %c0_13] : memref<2x1x16x256xf32, #tpu.memory_space<vmem>>, vector<1x1x16x256xf32>
    %7 = vector.shape_cast %6 : vector<1x1x16x256xf32> to vector<16x256xf32>
    %c0_14 = arith.constant 0 : index
    %c0_15 = arith.constant 0 : index
    %c0_16 = arith.constant 0 : index
    %8 = vector.load %arg4[%c0_14, %c0_15, %c0_16] : memref<2x16x16xf32, #tpu.memory_space<vmem>>, vector<1x16x16xf32>
    %9 = vector.shape_cast %8 : vector<1x16x16xf32> to vector<16x16xf32>
    %c1_17 = arith.constant 1 : index
    %c0_18 = arith.constant 0 : index
    %c0_19 = arith.constant 0 : index
    %10 = vector.load %arg4[%c1_17, %c0_18, %c0_19] : memref<2x16x16xf32, #tpu.memory_space<vmem>>, vector<1x16x16xf32>
    %11 = vector.shape_cast %10 : vector<1x16x16xf32> to vector<16x16xf32>
    %c0_20 = arith.constant 0 : index
    %c0_21 = arith.constant 0 : index
    %c0_22 = arith.constant 0 : index
    %12 = vector.load %arg5[%c0_20, %c0_21, %c0_22] : memref<2x16x1xf32, #tpu.memory_space<vmem>>, vector<1x16x1xf32>
    %13 = vector.shape_cast %12 : vector<1x16x1xf32> to vector<16x1xf32>
    %c1_23 = arith.constant 1 : index
    %c0_24 = arith.constant 0 : index
    %c0_25 = arith.constant 0 : index
    %14 = vector.load %arg5[%c1_23, %c0_24, %c0_25] : memref<2x16x1xf32, #tpu.memory_space<vmem>>, vector<1x16x1xf32>
    %15 = vector.shape_cast %14 : vector<1x16x1xf32> to vector<16x1xf32>
    %c0_26 = arith.constant 0 : index
    %c0_27 = arith.constant 0 : index
    %c0_28 = arith.constant 0 : index
    %16 = vector.load %arg6[%c0_26, %c0_27, %c0_28] : memref<2x16x16xf32, #tpu.memory_space<vmem>>, vector<1x16x16xf32>
    %17 = vector.shape_cast %16 : vector<1x16x16xf32> to vector<16x16xf32>
    %c1_29 = arith.constant 1 : index
    %c0_30 = arith.constant 0 : index
    %c0_31 = arith.constant 0 : index
    %18 = vector.load %arg6[%c1_29, %c0_30, %c0_31] : memref<2x16x16xf32, #tpu.memory_space<vmem>>, vector<1x16x16xf32>
    %19 = vector.shape_cast %18 : vector<1x16x16xf32> to vector<16x16xf32>
    %c0_32 = arith.constant 0 : index
    %c0_33 = arith.constant 0 : index
    %c0_34 = arith.constant 0 : index
    %20 = vector.load %arg7[%c0_32, %c0_33, %c0_34] : memref<2x16x1xf32, #tpu.memory_space<vmem>>, vector<1x16x1xf32>
    %21 = vector.shape_cast %20 : vector<1x16x1xf32> to vector<16x1xf32>
    %c1_35 = arith.constant 1 : index
    %c0_36 = arith.constant 0 : index
    %c0_37 = arith.constant 0 : index
    %22 = vector.load %arg7[%c1_35, %c0_36, %c0_37] : memref<2x16x1xf32, #tpu.memory_space<vmem>>, vector<1x16x1xf32>
    %23 = vector.shape_cast %22 : vector<1x16x1xf32> to vector<16x1xf32>
    %cst = arith.constant dense<0.000000e+00> : vector<16x256xf32>
    %24 = tpu.matmul %9, %1, %cst {dimension_numbers = #tpu.dot_dimension_numbers<[0], [0], [1], [1], [0, 1, 1, 1], [], []>} : vector<16x16xf32>, vector<16x256xf32>, vector<16x256xf32> -> vector<16x256xf32>
    %cst_38 = arith.constant dense<0.000000e+00> : vector<16x256xf32>
    %25 = tpu.matmul %11, %3, %cst_38 {dimension_numbers = #tpu.dot_dimension_numbers<[0], [0], [1], [1], [0, 1, 1, 1], [], []>} : vector<16x16xf32>, vector<16x256xf32>, vector<16x256xf32> -> vector<16x256xf32>
    %26 = arith.subf %24, %25 : vector<16x256xf32>
    %27 = vector.broadcast %13 : vector<16x1xf32> to vector<16x256xf32>
    %28 = arith.addf %26, %27 : vector<16x256xf32>
    %cst_39 = arith.constant 0.000000e+00 : f32
    %29 = vector.broadcast %cst_39 : f32 to vector<16x256xf32>
    %30 = arith.maximumf %28, %29 : vector<16x256xf32>
    %cst_40 = arith.constant dense<0.000000e+00> : vector<16x256xf32>
    %31 = tpu.matmul %9, %3, %cst_40 {dimension_numbers = #tpu.dot_dimension_numbers<[0], [0], [1], [1], [0, 1, 1, 1], [], []>} : vector<16x16xf32>, vector<16x256xf32>, vector<16x256xf32> -> vector<16x256xf32>
    %cst_41 = arith.constant dense<0.000000e+00> : vector<16x256xf32>
    %32 = tpu.matmul %11, %1, %cst_41 {dimension_numbers = #tpu.dot_dimension_numbers<[0], [0], [1], [1], [0, 1, 1, 1], [], []>} : vector<16x16xf32>, vector<16x256xf32>, vector<16x256xf32> -> vector<16x256xf32>
    %33 = arith.addf %31, %32 : vector<16x256xf32>
    %34 = vector.broadcast %15 : vector<16x1xf32> to vector<16x256xf32>
    %35 = arith.addf %33, %34 : vector<16x256xf32>
    %cst_42 = arith.constant 0.000000e+00 : f32
    %36 = vector.broadcast %cst_42 : f32 to vector<16x256xf32>
    %37 = arith.maximumf %35, %36 : vector<16x256xf32>
    %cst_43 = arith.constant dense<0.000000e+00> : vector<16x256xf32>
    %38 = tpu.matmul %17, %30, %cst_43 {dimension_numbers = #tpu.dot_dimension_numbers<[0], [0], [1], [1], [0, 1, 1, 1], [], []>} : vector<16x16xf32>, vector<16x256xf32>, vector<16x256xf32> -> vector<16x256xf32>
    %cst_44 = arith.constant dense<0.000000e+00> : vector<16x256xf32>
    %39 = tpu.matmul %19, %37, %cst_44 {dimension_numbers = #tpu.dot_dimension_numbers<[0], [0], [1], [1], [0, 1, 1, 1], [], []>} : vector<16x16xf32>, vector<16x256xf32>, vector<16x256xf32> -> vector<16x256xf32>
    %40 = arith.subf %38, %39 : vector<16x256xf32>
    %41 = vector.broadcast %21 : vector<16x1xf32> to vector<16x256xf32>
    %42 = arith.addf %40, %41 : vector<16x256xf32>
    %cst_45 = arith.constant dense<0.000000e+00> : vector<16x256xf32>
    %43 = tpu.matmul %17, %37, %cst_45 {dimension_numbers = #tpu.dot_dimension_numbers<[0], [0], [1], [1], [0, 1, 1, 1], [], []>} : vector<16x16xf32>, vector<16x256xf32>, vector<16x256xf32> -> vector<16x256xf32>
    %cst_46 = arith.constant dense<0.000000e+00> : vector<16x256xf32>
    %44 = tpu.matmul %19, %30, %cst_46 {dimension_numbers = #tpu.dot_dimension_numbers<[0], [0], [1], [1], [0, 1, 1, 1], [], []>} : vector<16x16xf32>, vector<16x256xf32>, vector<16x256xf32> -> vector<16x256xf32>
    %45 = arith.addf %43, %44 : vector<16x256xf32>
    %46 = vector.broadcast %23 : vector<16x1xf32> to vector<16x256xf32>
    %47 = arith.addf %45, %46 : vector<16x256xf32>
    %cst_47 = arith.constant 0.00999999977 : f32
    %48 = vector.broadcast %cst_47 : f32 to vector<16x256xf32>
    %49 = arith.cmpf ogt, %42, %48 : vector<16x256xf32>
    %cst_48 = arith.constant 0.00999999977 : f32
    %50 = vector.broadcast %cst_48 : f32 to vector<16x256xf32>
    %51 = arith.subf %42, %50 : vector<16x256xf32>
    %cst_49 = arith.constant -0.00999999977 : f32
    %52 = vector.broadcast %cst_49 : f32 to vector<16x256xf32>
    %53 = arith.cmpf olt, %42, %52 : vector<16x256xf32>
    %cst_50 = arith.constant 0.00999999977 : f32
    %54 = vector.broadcast %cst_50 : f32 to vector<16x256xf32>
    %55 = arith.addf %42, %54 : vector<16x256xf32>
    %cst_51 = arith.constant 0.000000e+00 : f32
    %56 = vector.broadcast %cst_51 : f32 to vector<16x256xf32>
    %57 = arith.select %53, %55, %56 : vector<16x256xi1>, vector<16x256xf32>
    %58 = arith.select %49, %51, %57 : vector<16x256xi1>, vector<16x256xf32>
    %cst_52 = arith.constant 0.00999999977 : f32
    %59 = vector.broadcast %cst_52 : f32 to vector<16x256xf32>
    %60 = arith.cmpf ogt, %47, %59 : vector<16x256xf32>
    %cst_53 = arith.constant 0.00999999977 : f32
    %61 = vector.broadcast %cst_53 : f32 to vector<16x256xf32>
    %62 = arith.subf %47, %61 : vector<16x256xf32>
    %cst_54 = arith.constant -0.00999999977 : f32
    %63 = vector.broadcast %cst_54 : f32 to vector<16x256xf32>
    %64 = arith.cmpf olt, %47, %63 : vector<16x256xf32>
    %cst_55 = arith.constant 0.00999999977 : f32
    %65 = vector.broadcast %cst_55 : f32 to vector<16x256xf32>
    %66 = arith.addf %47, %65 : vector<16x256xf32>
    %cst_56 = arith.constant 0.000000e+00 : f32
    %67 = vector.broadcast %cst_56 : f32 to vector<16x256xf32>
    %68 = arith.select %64, %66, %67 : vector<16x256xi1>, vector<16x256xf32>
    %69 = arith.select %60, %62, %68 : vector<16x256xi1>, vector<16x256xf32>
    %c0_57 = arith.constant 0 : index
    %c0_58 = arith.constant 0 : index
    %c0_59 = arith.constant 0 : index
    %70 = vector.load %arg8[%c0_57, %c0_58, %c0_59] : memref<2x16x16xf32, #tpu.memory_space<vmem>>, vector<1x16x16xf32>
    %71 = vector.shape_cast %70 : vector<1x16x16xf32> to vector<16x16xf32>
    %c1_60 = arith.constant 1 : index
    %c0_61 = arith.constant 0 : index
    %c0_62 = arith.constant 0 : index
    %72 = vector.load %arg8[%c1_60, %c0_61, %c0_62] : memref<2x16x16xf32, #tpu.memory_space<vmem>>, vector<1x16x16xf32>
    %73 = vector.shape_cast %72 : vector<1x16x16xf32> to vector<16x16xf32>
    %c0_63 = arith.constant 0 : index
    %c0_64 = arith.constant 0 : index
    %c0_65 = arith.constant 0 : index
    %74 = vector.load %arg9[%c0_63, %c0_64, %c0_65] : memref<2x16x1xf32, #tpu.memory_space<vmem>>, vector<1x16x1xf32>
    %75 = vector.shape_cast %74 : vector<1x16x1xf32> to vector<16x1xf32>
    %c1_66 = arith.constant 1 : index
    %c0_67 = arith.constant 0 : index
    %c0_68 = arith.constant 0 : index
    %76 = vector.load %arg9[%c1_66, %c0_67, %c0_68] : memref<2x16x1xf32, #tpu.memory_space<vmem>>, vector<1x16x1xf32>
    %77 = vector.shape_cast %76 : vector<1x16x1xf32> to vector<16x1xf32>
    %c0_69 = arith.constant 0 : index
    %c0_70 = arith.constant 0 : index
    %c0_71 = arith.constant 0 : index
    %78 = vector.load %arg10[%c0_69, %c0_70, %c0_71] : memref<2x16x16xf32, #tpu.memory_space<vmem>>, vector<1x16x16xf32>
    %79 = vector.shape_cast %78 : vector<1x16x16xf32> to vector<16x16xf32>
    %c1_72 = arith.constant 1 : index
    %c0_73 = arith.constant 0 : index
    %c0_74 = arith.constant 0 : index
    %80 = vector.load %arg10[%c1_72, %c0_73, %c0_74] : memref<2x16x16xf32, #tpu.memory_space<vmem>>, vector<1x16x16xf32>
    %81 = vector.shape_cast %80 : vector<1x16x16xf32> to vector<16x16xf32>
    %c0_75 = arith.constant 0 : index
    %c0_76 = arith.constant 0 : index
    %c0_77 = arith.constant 0 : index
    %82 = vector.load %arg11[%c0_75, %c0_76, %c0_77] : memref<2x16x1xf32, #tpu.memory_space<vmem>>, vector<1x16x1xf32>
    %83 = vector.shape_cast %82 : vector<1x16x1xf32> to vector<16x1xf32>
    %c1_78 = arith.constant 1 : index
    %c0_79 = arith.constant 0 : index
    %c0_80 = arith.constant 0 : index
    %84 = vector.load %arg11[%c1_78, %c0_79, %c0_80] : memref<2x16x1xf32, #tpu.memory_space<vmem>>, vector<1x16x1xf32>
    %85 = vector.shape_cast %84 : vector<1x16x1xf32> to vector<16x1xf32>
    %cst_81 = arith.constant dense<0.000000e+00> : vector<16x256xf32>
    %86 = tpu.matmul %71, %5, %cst_81 {dimension_numbers = #tpu.dot_dimension_numbers<[0], [0], [1], [1], [0, 1, 1, 1], [], []>} : vector<16x16xf32>, vector<16x256xf32>, vector<16x256xf32> -> vector<16x256xf32>
    %cst_82 = arith.constant dense<0.000000e+00> : vector<16x256xf32>
    %87 = tpu.matmul %73, %7, %cst_82 {dimension_numbers = #tpu.dot_dimension_numbers<[0], [0], [1], [1], [0, 1, 1, 1], [], []>} : vector<16x16xf32>, vector<16x256xf32>, vector<16x256xf32> -> vector<16x256xf32>
    %88 = arith.subf %86, %87 : vector<16x256xf32>
    %89 = vector.broadcast %75 : vector<16x1xf32> to vector<16x256xf32>
    %90 = arith.addf %88, %89 : vector<16x256xf32>
    %cst_83 = arith.constant 0.000000e+00 : f32
    %91 = vector.broadcast %cst_83 : f32 to vector<16x256xf32>
    %92 = arith.maximumf %90, %91 : vector<16x256xf32>
    %cst_84 = arith.constant dense<0.000000e+00> : vector<16x256xf32>
    %93 = tpu.matmul %71, %7, %cst_84 {dimension_numbers = #tpu.dot_dimension_numbers<[0], [0], [1], [1], [0, 1, 1, 1], [], []>} : vector<16x16xf32>, vector<16x256xf32>, vector<16x256xf32> -> vector<16x256xf32>
    %cst_85 = arith.constant dense<0.000000e+00> : vector<16x256xf32>
    %94 = tpu.matmul %73, %5, %cst_85 {dimension_numbers = #tpu.dot_dimension_numbers<[0], [0], [1], [1], [0, 1, 1, 1], [], []>} : vector<16x16xf32>, vector<16x256xf32>, vector<16x256xf32> -> vector<16x256xf32>
    %95 = arith.addf %93, %94 : vector<16x256xf32>
    %96 = vector.broadcast %77 : vector<16x1xf32> to vector<16x256xf32>
    %97 = arith.addf %95, %96 : vector<16x256xf32>
    %cst_86 = arith.constant 0.000000e+00 : f32
    %98 = vector.broadcast %cst_86 : f32 to vector<16x256xf32>
    %99 = arith.maximumf %97, %98 : vector<16x256xf32>
    %cst_87 = arith.constant dense<0.000000e+00> : vector<16x256xf32>
    %100 = tpu.matmul %79, %92, %cst_87 {dimension_numbers = #tpu.dot_dimension_numbers<[0], [0], [1], [1], [0, 1, 1, 1], [], []>} : vector<16x16xf32>, vector<16x256xf32>, vector<16x256xf32> -> vector<16x256xf32>
    %cst_88 = arith.constant dense<0.000000e+00> : vector<16x256xf32>
    %101 = tpu.matmul %81, %99, %cst_88 {dimension_numbers = #tpu.dot_dimension_numbers<[0], [0], [1], [1], [0, 1, 1, 1], [], []>} : vector<16x16xf32>, vector<16x256xf32>, vector<16x256xf32> -> vector<16x256xf32>
    %102 = arith.subf %100, %101 : vector<16x256xf32>
    %103 = vector.broadcast %83 : vector<16x1xf32> to vector<16x256xf32>
    %104 = arith.addf %102, %103 : vector<16x256xf32>
    %cst_89 = arith.constant dense<0.000000e+00> : vector<16x256xf32>
    %105 = tpu.matmul %79, %99, %cst_89 {dimension_numbers = #tpu.dot_dimension_numbers<[0], [0], [1], [1], [0, 1, 1, 1], [], []>} : vector<16x16xf32>, vector<16x256xf32>, vector<16x256xf32> -> vector<16x256xf32>
    %cst_90 = arith.constant dense<0.000000e+00> : vector<16x256xf32>
    %106 = tpu.matmul %81, %92, %cst_90 {dimension_numbers = #tpu.dot_dimension_numbers<[0], [0], [1], [1], [0, 1, 1, 1], [], []>} : vector<16x16xf32>, vector<16x256xf32>, vector<16x256xf32> -> vector<16x256xf32>
    %107 = arith.addf %105, %106 : vector<16x256xf32>
    %108 = vector.broadcast %85 : vector<16x1xf32> to vector<16x256xf32>
    %109 = arith.addf %107, %108 : vector<16x256xf32>
    %cst_91 = arith.constant 0.00999999977 : f32
    %110 = vector.broadcast %cst_91 : f32 to vector<16x256xf32>
    %111 = arith.cmpf ogt, %104, %110 : vector<16x256xf32>
    %cst_92 = arith.constant 0.00999999977 : f32
    %112 = vector.broadcast %cst_92 : f32 to vector<16x256xf32>
    %113 = arith.subf %104, %112 : vector<16x256xf32>
    %cst_93 = arith.constant -0.00999999977 : f32
    %114 = vector.broadcast %cst_93 : f32 to vector<16x256xf32>
    %115 = arith.cmpf olt, %104, %114 : vector<16x256xf32>
    %cst_94 = arith.constant 0.00999999977 : f32
    %116 = vector.broadcast %cst_94 : f32 to vector<16x256xf32>
    %117 = arith.addf %104, %116 : vector<16x256xf32>
    %cst_95 = arith.constant 0.000000e+00 : f32
    %118 = vector.broadcast %cst_95 : f32 to vector<16x256xf32>
    %119 = arith.select %115, %117, %118 : vector<16x256xi1>, vector<16x256xf32>
    %120 = arith.select %111, %113, %119 : vector<16x256xi1>, vector<16x256xf32>
    %cst_96 = arith.constant 0.00999999977 : f32
    %121 = vector.broadcast %cst_96 : f32 to vector<16x256xf32>
    %122 = arith.cmpf ogt, %109, %121 : vector<16x256xf32>
    %cst_97 = arith.constant 0.00999999977 : f32
    %123 = vector.broadcast %cst_97 : f32 to vector<16x256xf32>
    %124 = arith.subf %109, %123 : vector<16x256xf32>
    %cst_98 = arith.constant -0.00999999977 : f32
    %125 = vector.broadcast %cst_98 : f32 to vector<16x256xf32>
    %126 = arith.cmpf olt, %109, %125 : vector<16x256xf32>
    %cst_99 = arith.constant 0.00999999977 : f32
    %127 = vector.broadcast %cst_99 : f32 to vector<16x256xf32>
    %128 = arith.addf %109, %127 : vector<16x256xf32>
    %cst_100 = arith.constant 0.000000e+00 : f32
    %129 = vector.broadcast %cst_100 : f32 to vector<16x256xf32>
    %130 = arith.select %126, %128, %129 : vector<16x256xi1>, vector<16x256xf32>
    %131 = arith.select %122, %124, %130 : vector<16x256xi1>, vector<16x256xf32>
    %132 = arith.mulf %58, %120 : vector<16x256xf32>
    %133 = arith.mulf %69, %131 : vector<16x256xf32>
    %134 = arith.subf %132, %133 : vector<16x256xf32>
    %c0_101 = arith.constant 0 : index
    %c0_102 = arith.constant 0 : index
    %c0_103 = arith.constant 0 : index
    %c0_104 = arith.constant 0 : index
    %135 = vector.load %arg12[%c0_101, %c0_102, %c0_103, %c0_104] : memref<2x1x16x256xf32, #tpu.memory_space<vmem>>, vector<1x1x16x256xf32>
    %136 = vector.shape_cast %135 : vector<1x1x16x256xf32> to vector<16x256xf32>
    %137 = vector.shape_cast %134 : vector<16x256xf32> to vector<1x1x16x256xf32>
    tpu.vector_store %arg12[%c0_101, %c0_102, %c0_103, %c0_104], %137 {strides = array<i32>} : memref<2x1x16x256xf32, #tpu.memory_space<vmem>>, vector<1x1x16x256xf32>,
    %138 = arith.mulf %58, %131 : vector<16x256xf32>
    %139 = arith.mulf %69, %120 : vector<16x256xf32>
    %140 = arith.addf %138, %139 : vector<16x256xf32>
    %c1_105 = arith.constant 1 : index
    %c0_106 = arith.constant 0 : index
    %c0_107 = arith.constant 0 : index
    %c0_108 = arith.constant 0 : index
    %141 = vector.load %arg12[%c1_105, %c0_106, %c0_107, %c0_108] : memref<2x1x16x256xf32, #tpu.memory_space<vmem>>, vector<1x1x16x256xf32>
    %142 = vector.shape_cast %141 : vector<1x1x16x256xf32> to vector<16x256xf32>
    %143 = vector.shape_cast %140 : vector<16x256xf32> to vector<1x1x16x256xf32>
    tpu.vector_store %arg12[%c1_105, %c0_106, %c0_107, %c0_108], %143 {strides = array<i32>} : memref<2x1x16x256xf32, #tpu.memory_space<vmem>>, vector<1x1x16x256xf32>,
    return
  }
  func.func @transform_0(%arg0: i32, %arg1: i32) -> (i32, i32, i32, i32) {
    %c0_i32 = arith.constant 0 : i32
    %c0_i32_0 = arith.constant 0 : i32
    %c0_i32_1 = arith.constant 0 : i32
    return %c0_i32, %arg0, %c0_i32_0, %arg1 : i32, i32, i32, i32
  }
  func.func @transform_1(%arg0: i32, %arg1: i32) -> (i32, i32, i32, i32) {
    %c0_i32 = arith.constant 0 : i32
    %c0_i32_0 = arith.constant 0 : i32
    %c0_i32_1 = arith.constant 0 : i32
    return %c0_i32, %arg0, %c0_i32_0, %arg1 : i32, i32, i32, i32
  }
  func.func @transform_2(%arg0: i32, %arg1: i32) -> (i32, i32, i32) {
    %c0_i32 = arith.constant 0 : i32
    %c0_i32_0 = arith.constant 0 : i32
    %c0_i32_1 = arith.constant 0 : i32
    %c0_i32_2 = arith.constant 0 : i32
    return %c0_i32, %c0_i32_0, %c0_i32_1 : i32, i32, i32
  }
  func.func @transform_3(%arg0: i32, %arg1: i32) -> (i32, i32, i32) {
    %c0_i32 = arith.constant 0 : i32
    %c0_i32_0 = arith.constant 0 : i32
    %c0_i32_1 = arith.constant 0 : i32
    %c0_i32_2 = arith.constant 0 : i32
    return %c0_i32, %c0_i32_0, %c0_i32_1 : i32, i32, i32
  }
  func.func @transform_4(%arg0: i32, %arg1: i32) -> (i32, i32, i32) {
    %c0_i32 = arith.constant 0 : i32
    %c0_i32_0 = arith.constant 0 : i32
    %c0_i32_1 = arith.constant 0 : i32
    %c0_i32_2 = arith.constant 0 : i32
    return %c0_i32, %c0_i32_0, %c0_i32_1 : i32, i32, i32
  }
  func.func @transform_5(%arg0: i32, %arg1: i32) -> (i32, i32, i32) {
    %c0_i32 = arith.constant 0 : i32
    %c0_i32_0 = arith.constant 0 : i32
    %c0_i32_1 = arith.constant 0 : i32
    %c0_i32_2 = arith.constant 0 : i32
    return %c0_i32, %c0_i32_0, %c0_i32_1 : i32, i32, i32
  }
  func.func @transform_6(%arg0: i32, %arg1: i32) -> (i32, i32, i32) {
    %c0_i32 = arith.constant 0 : i32
    %c0_i32_0 = arith.constant 0 : i32
    %c0_i32_1 = arith.constant 0 : i32
    %c0_i32_2 = arith.constant 0 : i32
    return %c0_i32, %c0_i32_0, %c0_i32_1 : i32, i32, i32
  }
  func.func @transform_7(%arg0: i32, %arg1: i32) -> (i32, i32, i32) {
    %c0_i32 = arith.constant 0 : i32
    %c0_i32_0 = arith.constant 0 : i32
    %c0_i32_1 = arith.constant 0 : i32
    %c0_i32_2 = arith.constant 0 : i32
    return %c0_i32, %c0_i32_0, %c0_i32_1 : i32, i32, i32
  }
  func.func @transform_8(%arg0: i32, %arg1: i32) -> (i32, i32, i32) {
    %c0_i32 = arith.constant 0 : i32
    %c0_i32_0 = arith.constant 0 : i32
    %c0_i32_1 = arith.constant 0 : i32
    %c0_i32_2 = arith.constant 0 : i32
    return %c0_i32, %c0_i32_0, %c0_i32_1 : i32, i32, i32
  }
  func.func @transform_9(%arg0: i32, %arg1: i32) -> (i32, i32, i32) {
    %c0_i32 = arith.constant 0 : i32
    %c0_i32_0 = arith.constant 0 : i32
    %c0_i32_1 = arith.constant 0 : i32
    %c0_i32_2 = arith.constant 0 : i32
    return %c0_i32, %c0_i32_0, %c0_i32_1 : i32, i32, i32
  }
  func.func @transform_10(%arg0: i32, %arg1: i32) -> (i32, i32, i32, i32) {
    %c0_i32 = arith.constant 0 : i32
    %c0_i32_0 = arith.constant 0 : i32
    %c0_i32_1 = arith.constant 0 : i32
    return %c0_i32, %arg0, %c0_i32_0, %arg1 : i32, i32, i32, i32
  }
}

</mosaic_0001>

<llo_original>
// kernel: tpu_custom_call.1
$region0: #{tpu_custom_call.1}
  #allocation0 [shape = 'u32[]', space=smem, size = 0x4, offset = 0x4, fixed_abs, tag = 'smem constant byte address 0x4 - core index']
  #allocation1 [shape = 'u32[144,128]{1,0:T(1,128)}', space=vmem, size = 0x12000, scoped, tag = 'internal scratch']
  #allocation12 [shape = 's32[]', space=sflag, size = 0x4, offset = 0, fixed_abs, tag = 'sflag constant byte address 0x0 - dummy sync flag']
  #allocation14 [shape = 's32[]', space=sflag, size = 0x4, offset = 0, fixed_abs, tag = 'sflag constant byte address 0x0 - dummy sync flag']
  %s0 = inlined_call_operand.vmem [shape: f32[2,2,16,256], index: 0, kind: input, shape index: {}]
  %s1 = inlined_call_operand.hbm [shape: f32[2,2,16,256], index: 1, kind: input, shape index: {}]
  %s2 = inlined_call_operand.hbm [shape: f32[2,16,16], index: 2, kind: input, shape index: {}]
  %s3 = inlined_call_operand.vmem [shape: f32[2,16,1], index: 3, kind: input, shape index: {}]
  %s4 = inlined_call_operand.hbm [shape: f32[2,16,16], index: 4, kind: input, shape index: {}]
  %s5 = inlined_call_operand.vmem [shape: f32[2,16,1], index: 5, kind: input, shape index: {}]
  %s6 = inlined_call_operand.hbm [shape: f32[2,16,16], index: 6, kind: input, shape index: {}]
  %s7 = inlined_call_operand.vmem [shape: f32[2,16,1], index: 7, kind: input, shape index: {}]
  %s8 = inlined_call_operand.vmem [shape: f32[2,16,16], index: 8, kind: input, shape index: {}]
  %s9 = inlined_call_operand.vmem [shape: f32[2,16,1], index: 9, kind: input, shape index: {}]
  %s10 = inlined_call_operand.hbm [shape: f32[2,2,16,256], index: 10, kind: output, shape index: {}]
  %s11 = sld [smem:[#allocation0]]
  $region112: #{tpu_custom_call.1} parent=0
    _
  %s13 = ssub.s32 1, %s11
  %s14 = scalar_select 0, %s13, %s11
  $region1: #{tpu_custom_call.1} parent=0
    #allocation2 [shape = 'u8[65536]{0}', space=vmem, size = 0x10000, scoped, tag = 'input window, operand 0']
    #allocation3 [shape = 'u8[65536]{0}', space=vmem, size = 0x10000, scoped, tag = 'input window, operand 1']
    #allocation4 [shape = 's32[2]{0}', space=sflag, size = 0x8, scoped, tag = 'scoped memory for tpu_custom_call.1']
    #allocation5 [shape = 's32[2]{0}', space=sflag, size = 0x8, scoped, tag = 'scoped memory for tpu_custom_call.1']
    #allocation6 [shape = 'u8[16384]{0}', space=vmem, size = 0x4000, scoped, tag = 'input window, operand 2, single buffered']
    #allocation7 [shape = 's32[1]{0}', space=sflag, size = 0x4, scoped, tag = 'scoped memory for tpu_custom_call.1']
    #allocation8 [shape = 'u8[16384]{0}', space=vmem, size = 0x4000, scoped, tag = 'input window, operand 4, single buffered']
    #allocation9 [shape = 'u8[16384]{0}', space=vmem, size = 0x4000, scoped, tag = 'input window, operand 6, single buffered']
    #allocation10 [shape = 's32[1]{0}', space=sflag, size = 0x4, scoped, tag = 'scoped memory for tpu_custom_call.1']
    #allocation11 [shape = 'u8[65536]{0}', space=vmem, size = 0x10000, scoped, tag = 'output window, operand 0']
    %15 = vsyncpa [#allocation4], 0
    %s16 = scalar_lea.sflag [#allocation4], 1
    %17 = vsyncpa %s16, 0
    %18 = vsyncpa [#allocation7], 0
    %19 = vsyncpa [#allocation10], 0
    %20 = vsyncpa [#allocation5], 0
    %s21 = scalar_lea.sflag [#allocation5], 1
    %22 = vsyncpa %s21, 0
    loop: start=0, step=1, limit=4
    $region2: #{tpu_custom_call.1} parent=1 // loop_pre_header
      _
    $region3: #{tpu_custom_call.1} parent=1 // loop_header
      %s24 = sphi 0, %s28
      %p25 = scmp.ge.s32.totalorder %s24, 4
      %s31 = sphi 0, %s43
      %s32 = sphi 0, %s39
      %s33 = sphi 0, %s31
      %s34 = sphi 0, %s32
      %s35 = sphi 0, %s33
      %s36 = sphi 0, %s34
      %s48 = sphi 0, %s50
      %s51 = sphi 0, %s48
      %s52 = sphi 0, %s51
      %s68 = sphi 0, %s52
      %s76 = sphi 0, %s78
      %s79 = sphi 0, %s76
      %s80 = sphi 0, %s79
      %s96 = sphi 0, %s80
      %s100 = sphi 0, %s100
      %s102 = sphi 0, %s100
      %s103 = sphi 0, %s102
      %s117 = sphi 0, %s103
      %s121 = sphi 0, %s121
      %s123 = sphi 0, %s121
      %s124 = sphi 0, %s123
      %s138 = sphi 0, %s124
      %s142 = sphi 0, %s142
      %s144 = sphi 0, %s142
      %s145 = sphi 0, %s144
      %s159 = sphi 0, %s145
      %s163 = sphi 0, %s163
      %s165 = sphi 0, %s163
      %s166 = sphi 0, %s165
      %s180 = sphi 0, %s166
      %s184 = sphi 0, %s184
      %s186 = sphi 0, %s184
      %s187 = sphi 0, %s186
      %s201 = sphi 0, %s187
      %s205 = sphi 0, %s205
      %s207 = sphi 0, %s205
      %s208 = sphi 0, %s207
      %s222 = sphi 0, %s208
      %s226 = sphi 0, %s226
      %s228 = sphi 0, %s226
      %s229 = sphi 0, %s228
      %s243 = sphi 0, %s229
      %s247 = sphi 0, %s247
      %s249 = sphi 0, %s247
      %s250 = sphi 0, %s249
      %s264 = sphi 0, %s250
      %s272 = sphi 0, %s274
      %s275 = sphi 0, %s272
      %s276 = sphi 0, %s275
      %s292 = sphi 0, %s276
    $region4: #{tpu_custom_call.1} parent=1 // loop_header_branch
      %27 = sbr.rel (%p25) target = $region8
    $region5: #{tpu_custom_call.1} parent=1 // loop_body
      %s29 = ssub.s32 %s24, 1
      %s30 = ssub.s32 %s24, 2
      %s37 = sadd.s32 1, %s32
      %p38 = scmp.ge.s32.totalorder %s37, 1
      %s39 = scalar_select %p38, 0, %s37
      %s40 = sadd.s32 1, %s31
      %s41 = scalar_select %p38, %s40, %s31
      %p42 = scmp.ge.s32.totalorder %s41, 2
      %s43 = scalar_select %p42, 0, %s41
      %s44 = ssub.s32 %s31, %s43
      %s45 = ssub.s32 %s32, %s39
      %s46 = sor.u32 %s44, %s45
      %p47 = scmp.eq.s32.totalorder %s46, 0
      %s49 = sadd.s32 %s48, 1
      %s50 = scalar_select %p47, %s48, %s49
      %p53 = pneg %p47
      %p54 = scmp.eq.s32.totalorder %s24, 1
      %p55 = por %p53, %p54
      %p56 = scmp.ne.s32.totalorder %s48, %s51
      %p57 = scmp.eq.s32.totalorder %s24, 0
      %p58 = por %p56, %p57
      %p59 = scmp.ne.s32.totalorder %s48, %s51
      %p60 = scmp.eq.s32.totalorder %s29, 1
      %p61 = por %p59, %p60
      %p62 = scmp.ne.s32.totalorder %s51, %s52
      %p63 = scmp.eq.s32.totalorder %s29, 0
      %p64 = por %p62, %p63
      %p65 = scmp.ne.s32.totalorder %s51, %s52
      %p66 = scmp.eq.s32.totalorder %s30, 1
      %p67 = por %p65, %p66
      %p69 = scmp.ne.s32.totalorder %s52, %s68
      %p70 = scmp.eq.s32.totalorder %s30, 0
      %p71 = por %p69, %p70
      %s72 = ssub.s32 %s31, %s43
      %s73 = ssub.s32 %s32, %s39
      %s74 = sor.u32 %s72, %s73
      %p75 = scmp.eq.s32.totalorder %s74, 0
      %s77 = sadd.s32 %s76, 1
      %s78 = scalar_select %p75, %s76, %s77
      %p81 = pneg %p75
      %p82 = scmp.eq.s32.totalorder %s24, 1
      %p83 = por %p81, %p82
      %p84 = scmp.ne.s32.totalorder %s76, %s79
      %p85 = scmp.eq.s32.totalorder %s24, 0
      %p86 = por %p84, %p85
      %p87 = scmp.ne.s32.totalorder %s76, %s79
      %p88 = scmp.eq.s32.totalorder %s29, 1
      %p89 = por %p87, %p88
      %p90 = scmp.ne.s32.totalorder %s79, %s80
      %p91 = scmp.eq.s32.totalorder %s29, 0
      %p92 = por %p90, %p91
      %p93 = scmp.ne.s32.totalorder %s79, %s80
      %p94 = scmp.eq.s32.totalorder %s30, 1
      %p95 = por %p93, %p94
      %p97 = scmp.ne.s32.totalorder %s80, %s96
      %p98 = scmp.eq.s32.totalorder %s30, 0
      %p99 = por %p97, %p98
      %s101 = sadd.s32 %s100, 1
      %p104 = scmp.eq.s32.totalorder %s24, 1
      %p105 = scmp.ne.s32.totalorder %s100, %s102
      %p106 = scmp.eq.s32.totalorder %s24, 0
      %p107 = por %p105, %p106
      %p108 = scmp.ne.s32.totalorder %s100, %s102
      %p109 = scmp.eq.s32.totalorder %s29, 1
      %p110 = por %p108, %p109
      %p111 = scmp.ne.s32.totalorder %s102, %s103
      %p112 = scmp.eq.s32.totalorder %s29, 0
      %p113 = por %p111, %p112
      %p114 = scmp.ne.s32.totalorder %s102, %s103
      %p115 = scmp.eq.s32.totalorder %s30, 1
      %p116 = por %p114, %p115
      %p118 = scmp.ne.s32.totalorder %s103, %s117
      %p119 = scmp.eq.s32.totalorder %s30, 0
      %p120 = por %p118, %p119
      %s122 = sadd.s32 %s121, 1
      %p125 = scmp.eq.s32.totalorder %s24, 1
      %p126 = scmp.ne.s32.totalorder %s121, %s123
      %p127 = scmp.eq.s32.totalorder %s24, 0
      %p128 = por %p126, %p127
      %p129 = scmp.ne.s32.totalorder %s121, %s123
      %p130 = scmp.eq.s32.totalorder %s29, 1
      %p131 = por %p129, %p130
      %p132 = scmp.ne.s32.totalorder %s123, %s124
      %p133 = scmp.eq.s32.totalorder %s29, 0
      %p134 = por %p132, %p133
      %p135 = scmp.ne.s32.totalorder %s123, %s124
      %p136 = scmp.eq.s32.totalorder %s30, 1
      %p137 = por %p135, %p136
      %p139 = scmp.ne.s32.totalorder %s124, %s138
      %p140 = scmp.eq.s32.totalorder %s30, 0
      %p141 = por %p139, %p140
      %s143 = sadd.s32 %s142, 1
      %p146 = scmp.eq.s32.totalorder %s24, 1
      %p147 = scmp.ne.s32.totalorder %s142, %s144
      %p148 = scmp.eq.s32.totalorder %s24, 0
      %p149 = por %p147, %p148
      %p150 = scmp.ne.s32.totalorder %s142, %s144
      %p151 = scmp.eq.s32.totalorder %s29, 1
      %p152 = por %p150, %p151
      %p153 = scmp.ne.s32.totalorder %s144, %s145
      %p154 = scmp.eq.s32.totalorder %s29, 0
      %p155 = por %p153, %p154
      %p156 = scmp.ne.s32.totalorder %s144, %s145
      %p157 = scmp.eq.s32.totalorder %s30, 1
      %p158 = por %p156, %p157
      %p160 = scmp.ne.s32.totalorder %s145, %s159
      %p161 = scmp.eq.s32.totalorder %s30, 0
      %p162 = por %p160, %p161
      %s164 = sadd.s32 %s163, 1
      %p167 = scmp.eq.s32.totalorder %s24, 1
      %p168 = scmp.ne.s32.totalorder %s163, %s165
      %p169 = scmp.eq.s32.totalorder %s24, 0
      %p170 = por %p168, %p169
      %p171 = scmp.ne.s32.totalorder %s163, %s165
      %p172 = scmp.eq.s32.totalorder %s29, 1
      %p173 = por %p171, %p172
      %p174 = scmp.ne.s32.totalorder %s165, %s166
      %p175 = scmp.eq.s32.totalorder %s29, 0
      %p176 = por %p174, %p175
      %p177 = scmp.ne.s32.totalorder %s165, %s166
      %p178 = scmp.eq.s32.totalorder %s30, 1
      %p179 = por %p177, %p178
      %p181 = scmp.ne.s32.totalorder %s166, %s180
      %p182 = scmp.eq.s32.totalorder %s30, 0
      %p183 = por %p181, %p182
      %s185 = sadd.s32 %s184, 1
      %p188 = scmp.eq.s32.totalorder %s24, 1
      %p189 = scmp.ne.s32.totalorder %s184, %s186
      %p190 = scmp.eq.s32.totalorder %s24, 0
      %p191 = por %p189, %p190
      %p192 = scmp.ne.s32.totalorder %s184, %s186
      %p193 = scmp.eq.s32.totalorder %s29, 1
      %p194 = por %p192, %p193
      %p195 = scmp.ne.s32.totalorder %s186, %s187
      %p196 = scmp.eq.s32.totalorder %s29, 0
      %p197 = por %p195, %p196
      %p198 = scmp.ne.s32.totalorder %s186, %s187
      %p199 = scmp.eq.s32.totalorder %s30, 1
      %p200 = por %p198, %p199
      %p202 = scmp.ne.s32.totalorder %s187, %s201
      %p203 = scmp.eq.s32.totalorder %s30, 0
      %p204 = por %p202, %p203
      %s206 = sadd.s32 %s205, 1
      %p209 = scmp.eq.s32.totalorder %s24, 1
      %p210 = scmp.ne.s32.totalorder %s205, %s207
      %p211 = scmp.eq.s32.totalorder %s24, 0
      %p212 = por %p210, %p211
      %p213 = scmp.ne.s32.totalorder %s205, %s207
      %p214 = scmp.eq.s32.totalorder %s29, 1
      %p215 = por %p213, %p214
      %p216 = scmp.ne.s32.totalorder %s207, %s208
      %p217 = scmp.eq.s32.totalorder %s29, 0
      %p218 = por %p216, %p217
      %p219 = scmp.ne.s32.totalorder %s207, %s208
      %p220 = scmp.eq.s32.totalorder %s30, 1
      %p221 = por %p219, %p220
      %p223 = scmp.ne.s32.totalorder %s208, %s222
      %p224 = scmp.eq.s32.totalorder %s30, 0
      %p225 = por %p223, %p224
      %s227 = sadd.s32 %s226, 1
      %p230 = scmp.eq.s32.totalorder %s24, 1
      %p231 = scmp.ne.s32.totalorder %s226, %s228
      %p232 = scmp.eq.s32.totalorder %s24, 0
      %p233 = por %p231, %p232
      %p234 = scmp.ne.s32.totalorder %s226, %s228
      %p235 = scmp.eq.s32.totalorder %s29, 1
      %p236 = por %p234, %p235
      %p237 = scmp.ne.s32.totalorder %s228, %s229
      %p238 = scmp.eq.s32.totalorder %s29, 0
      %p239 = por %p237, %p238
      %p240 = scmp.ne.s32.totalorder %s228, %s229
      %p241 = scmp.eq.s32.totalorder %s30, 1
      %p242 = por %p240, %p241
      %p244 = scmp.ne.s32.totalorder %s229, %s243
      %p245 = scmp.eq.s32.totalorder %s30, 0
      %p246 = por %p244, %p245
      %s248 = sadd.s32 %s247, 1
      %p251 = scmp.eq.s32.totalorder %s24, 1
      %p252 = scmp.ne.s32.totalorder %s247, %s249
      %p253 = scmp.eq.s32.totalorder %s24, 0
      %p254 = por %p252, %p253
      %p255 = scmp.ne.s32.totalorder %s247, %s249
      %p256 = scmp.eq.s32.totalorder %s29, 1
      %p257 = por %p255, %p256
      %p258 = scmp.ne.s32.totalorder %s249, %s250
      %p259 = scmp.eq.s32.totalorder %s29, 0
      %p260 = por %p258, %p259
      %p261 = scmp.ne.s32.totalorder %s249, %s250
      %p262 = scmp.eq.s32.totalorder %s30, 1
      %p263 = por %p261, %p262
      %p265 = scmp.ne.s32.totalorder %s250, %s264
      %p266 = scmp.eq.s32.totalorder %s30, 0
      %p267 = por %p265, %p266
      %s268 = ssub.s32 %s31, %s43
      %s269 = ssub.s32 %s32, %s39
      %s270 = sor.u32 %s268, %s269
      %p271 = scmp.eq.s32.totalorder %s270, 0
      %s273 = sadd.s32 %s272, 1
      %s274 = scalar_select %p271, %s272, %s273
      %p277 = pneg %p271
      %p278 = scmp.eq.s32.totalorder %s24, 1
      %p279 = por %p277, %p278
      %p280 = scmp.ne.s32.totalorder %s272, %s275
      %p281 = scmp.eq.s32.totalorder %s24, 0
      %p282 = por %p280, %p281
      %p283 = scmp.ne.s32.totalorder %s272, %s275
      %p284 = scmp.eq.s32.totalorder %s29, 1
      %p285 = por %p283, %p284
      %p286 = scmp.ne.s32.totalorder %s275, %s276
      %p287 = scmp.eq.s32.totalorder %s29, 0
      %p288 = por %p286, %p287
      %p289 = scmp.ne.s32.totalorder %s275, %s276
      %p290 = scmp.eq.s32.totalorder %s30, 1
      %p291 = por %p289, %p290
      %p293 = scmp.ne.s32.totalorder %s276, %s292
      %p294 = scmp.eq.s32.totalorder %s30, 0
      %p295 = por %p293, %p294
      %p296 = scmp.le.s32.totalorder 1, %s24
      %p297 = scmp.lt.s32.totalorder %s24, 3
      %p298 = pnand %p296, %p297
      %p299 = pneg %p298
      // Predicated region
      $region9: #{tpu_custom_call.1} parent=5 // pred_check
        _
      $region10: #{tpu_custom_call.1} parent=5 // pred_check_branch
        %301 = sbr.rel (%p298) target = $region12
      $region11: #{tpu_custom_call.1} parent=5 // pred_region
        %s302 = ssub.s32 %s24, 1
        // Predicated region
        $region13: #{tpu_custom_call.1} parent=11 // pred_check
          %p303 = pneg %p113
        $region14: #{tpu_custom_call.1} parent=11 // pred_check_branch
          %305 = sbr.rel (%p303) target = $region16
        $region15: #{tpu_custom_call.1} parent=11 // pred_region
          %s307 = ssub.s32 512, 512
          %308 = vsyncadd [#allocation7], %s307
          %s309 = sshll.u32 [#allocation6], 4
          %s310 = int_to_ptr.vmem [resolvable:$true] %s309
          %315 = dma.hbm_to_vmem [thread:$0]  %s2, 512, %s310, [#allocation7], 128, 128, 8
        $region16: #{tpu_custom_call.1} parent=11 // pred_fallthru
          _
        // Predicated region
        $region17: #{tpu_custom_call.1} parent=11 // pred_check
          %p316 = pneg %p134
        $region18: #{tpu_custom_call.1} parent=11 // pred_check_branch
          %318 = sbr.rel (%p316) target = $region20
        $region19: #{tpu_custom_call.1} parent=11 // pred_region
          _
        $region20: #{tpu_custom_call.1} parent=11 // pred_fallthru
          _
        // Predicated region
        $region21: #{tpu_custom_call.1} parent=11 // pred_check
          %p319 = pneg %p155
        $region22: #{tpu_custom_call.1} parent=11 // pred_check_branch
          %321 = sbr.rel (%p319) target = $region24
        $region23: #{tpu_custom_call.1} parent=11 // pred_region
          %s323 = ssub.s32 512, 512
          %324 = vsyncadd [#allocation7], %s323
          %s325 = sshll.u32 [#allocation8], 4
          %s326 = int_to_ptr.vmem [resolvable:$true] %s325
          %331 = dma.hbm_to_vmem [thread:$0]  %s4, 512, %s326, [#allocation7], 128, 128, 8
        $region24: #{tpu_custom_call.1} parent=11 // pred_fallthru
          _
        // Predicated region
        $region25: #{tpu_custom_call.1} parent=11 // pred_check
          %p332 = pneg %p176
        $region26: #{tpu_custom_call.1} parent=11 // pred_check_branch
          %334 = sbr.rel (%p332) target = $region28
        $region27: #{tpu_custom_call.1} parent=11 // pred_region
          _
        $region28: #{tpu_custom_call.1} parent=11 // pred_fallthru
          _
        // Predicated region
        $region29: #{tpu_custom_call.1} parent=11 // pred_check
          %p335 = pneg %p197
        $region30: #{tpu_custom_call.1} parent=11 // pred_check_branch
          %337 = sbr.rel (%p335) target = $region32
        $region31: #{tpu_custom_call.1} parent=11 // pred_region
          %s339 = ssub.s32 512, 512
          %340 = vsyncadd [#allocation10], %s339
          %s341 = sshll.u32 [#allocation9], 4
          %s342 = int_to_ptr.vmem [resolvable:$true] %s341
          %347 = dma.hbm_to_vmem [thread:$0]  %s6, 512, %s342, [#allocation10], 128, 128, 8
        $region32: #{tpu_custom_call.1} parent=11 // pred_fallthru
          _
        // Predicated region
        $region33: #{tpu_custom_call.1} parent=11 // pred_check
          %p348 = pneg %p218
        $region34: #{tpu_custom_call.1} parent=11 // pred_check_branch
          %350 = sbr.rel (%p348) target = $region36
        $region35: #{tpu_custom_call.1} parent=11 // pred_region
          _
        $region36: #{tpu_custom_call.1} parent=11 // pred_fallthru
          _
        // Predicated region
        $region37: #{tpu_custom_call.1} parent=11 // pred_check
          %p351 = pneg %p239
        $region38: #{tpu_custom_call.1} parent=11 // pred_check_branch
          %353 = sbr.rel (%p351) target = $region40
        $region39: #{tpu_custom_call.1} parent=11 // pred_region
          _
        $region40: #{tpu_custom_call.1} parent=11 // pred_fallthru
          _
        // Predicated region
        $region41: #{tpu_custom_call.1} parent=11 // pred_check
          %p354 = pneg %p260
        $region42: #{tpu_custom_call.1} parent=11 // pred_check_branch
          %356 = sbr.rel (%p354) target = $region44
        $region43: #{tpu_custom_call.1} parent=11 // pred_region
          _
        $region44: #{tpu_custom_call.1} parent=11 // pred_fallthru
          _
      $region12: #{tpu_custom_call.1} parent=5 // pred_fallthru
        _
      %p357 = scmp.lt.s32.totalorder %s24, 2
      // Predicated region
      $region45: #{tpu_custom_call.1} parent=5 // pred_check
        %p358 = pneg %p357
      $region46: #{tpu_custom_call.1} parent=5 // pred_check_branch
        %360 = sbr.rel (%p358) target = $region48
      $region47: #{tpu_custom_call.1} parent=5 // pred_region
        // Predicated region
        $region49: #{tpu_custom_call.1} parent=47 // pred_check
          %p361 = pneg %p58
        $region50: #{tpu_custom_call.1} parent=47 // pred_check_branch
          %363 = sbr.rel (%p361) target = $region52
        $region51: #{tpu_custom_call.1} parent=47 // pred_region
          %s364 = sand.u32 %s48, 1
          %s365 = sand.u32 %s48, 1
          %s366 = smul.addr %s365, 64
          %s367 = scalar_lea.vmem [#allocation2], %s366
          %s368 = smul.u32 2, %s32
          %s369 = smul.addr %s31, 4
          %s370 = sadd.s32 %s368, %s369
          %s371 = smul.addr %s370, 8
          %s372 = scalar_lea.vmem %s0, %s371
          // Predicated region
          $region53: #{tpu_custom_call.1} parent=51 // pred_check
            _
          $region54: #{tpu_custom_call.1} parent=51 // pred_check_branch
            %374 = sbr.rel (0) target = $region56
          $region55: #{tpu_custom_call.1} parent=51 // pred_region
            // Predicated region
            $region57: #{tpu_custom_call.1} parent=55 // pred_check
              _
            $region58: #{tpu_custom_call.1} parent=55 // pred_check_branch
              %376 = sbr.rel (0) target = $region60
            $region59: #{tpu_custom_call.1} parent=55 // pred_region
              loop: start=0, step=1, limit=1
              $region61: #{tpu_custom_call.1} parent=59 // loop_pre_header
                _
              $region62: #{tpu_custom_call.1} parent=59 // loop_header
                %s378 = sphi 0, %s382
                %p379 = scmp.ge.s32.totalorder %s378, 1
                %s383 = sphi %s372, %s372
                %s384 = sphi %s367, %s367
              $region63: #{tpu_custom_call.1} parent=59 // loop_header_branch
                %381 = sbr.rel (%p379) target = $region67
              $region64: #{tpu_custom_call.1} parent=59 // loop_body
                %v385 = vld [vmem:[%s383] sm:$0xff]
                %386 = vst [vmem:[%s384] sm:$0xff] %v385
                %v387 = vld [vmem:[%s383 + $0x8] sm:$0xff]
                %388 = vst [vmem:[%s384 + $0x8] sm:$0xff] %v387
                %v389 = vld [vmem:[%s383 + $0x10] sm:$0xff]
                %390 = vst [vmem:[%s384 + $0x10] sm:$0xff] %v389
                %v391 = vld [vmem:[%s383 + $0x18] sm:$0xff]
                %392 = vst [vmem:[%s384 + $0x18] sm:$0xff] %v391
                %v393 = vld [vmem:[%s383 + $0x40] sm:$0xff]
                %394 = vst [vmem:[%s384 + $0x20] sm:$0xff] %v393
                %v395 = vld [vmem:[%s383 + $0x48] sm:$0xff]
                %396 = vst [vmem:[%s384 + $0x28] sm:$0xff] %v395
                %v397 = vld [vmem:[%s383 + $0x50] sm:$0xff]
                %398 = vst [vmem:[%s384 + $0x30] sm:$0xff] %v397
                %v399 = vld [vmem:[%s383 + $0x58] sm:$0xff]
                %400 = vst [vmem:[%s384 + $0x38] sm:$0xff] %v399
              $region65: #{tpu_custom_call.1} parent=59 // loop_footer
                %s382 = sadd.s32 1, %s378
              $region66: #{tpu_custom_call.1} parent=59 // loop_footer_branch
                %377 = sbr.rel target = $region62
              $region67: #{tpu_custom_call.1} parent=59 // loop_exit
                _
            $region60: #{tpu_custom_call.1} parent=55 // pred_fallthru
              _
            // Predicated region
            $region68: #{tpu_custom_call.1} parent=55 // pred_check
              _
            $region69: #{tpu_custom_call.1} parent=55 // pred_check_branch
              %402 = sbr.rel target = $region71
            $region70: #{tpu_custom_call.1} parent=55 // pred_region
              _
            $region71: #{tpu_custom_call.1} parent=55 // pred_fallthru
              _
          $region56: #{tpu_custom_call.1} parent=51 // pred_fallthru
            _
          %403 = vnop
        $region52: #{tpu_custom_call.1} parent=47 // pred_fallthru
          _
        // Predicated region
        $region72: #{tpu_custom_call.1} parent=47 // pred_check
          %p404 = pneg %p86
        $region73: #{tpu_custom_call.1} parent=47 // pred_check_branch
          %406 = sbr.rel (%p404) target = $region75
        $region74: #{tpu_custom_call.1} parent=47 // pred_region
          #allocation13 [shape = 'u32[6]{0}', space=smem, size = 0x18, scoped, tag = 'DMA stride descriptor']
          %s407 = sand.u32 %s76, 1
          %s408 = scalar_lea.sflag [#allocation4], %s407
          %s409 = sand.u32 %s76, 1
          %s410 = smul.addr %s409, 64
          %s411 = scalar_lea.vmem [#allocation3], %s410
          %s412 = smul.u32 2, %s32
          %s414 = ssub.s32 1024, 1024
          %415 = vsyncadd %s408, %s414
          %s416 = smul.addr %s31, 4
          %s417 = sadd.s32 %s412, %s416
          %s418 = smul.addr %s417, 128
          %s419 = scalar_lea.hbm %s1, %s418
          %s421 = sshll.u32 1, 14
          %s422 = sxor.u32 4294967295, %s421
          %s424 = sld [smem:[#allocation0]]
          %s425 = sadd.s32 2, %s424
          %s427 = sshll.u32 7, 26
          %s428 = sxor.u32 4294967295, %s427
          %s429 = sand.u32 0, %s428
          %s430 = sshll.u32 %s425, 26
          %s431 = sor.u32 %s429, %s430
          %s432 = sshll.u32 %s411, 4
          %s433 = int_to_ptr.vmem [resolvable:$true] %s432
          %439 = sst [smem:[#allocation13]] 1024
          %s440 = scalar_lea.smem [#allocation13], 1
          %441 = sst [smem:[%s440]] 512
          %s442 = scalar_lea.smem [#allocation13], 2
          %443 = sst [smem:[%s442]] 2
          %s444 = scalar_lea.smem [#allocation13], 3
          %445 = sst [smem:[%s444]] 256
          %s446 = scalar_lea.smem [#allocation13], 4
          %447 = sst [smem:[%s446]] 256
          %s448 = scalar_lea.smem [#allocation13], 5
          %449 = sst [smem:[%s448]] 16
          %451 = dma.general %s419, 1024, %s433, %s408, [#allocation12], [#allocation13], %s431, 0
        $region75: #{tpu_custom_call.1} parent=47 // pred_fallthru
          _
      $region48: #{tpu_custom_call.1} parent=5 // pred_fallthru
        _
      %p452 = scmp.le.s32.totalorder 1, %s24
      %p453 = scmp.lt.s32.totalorder %s24, 3
      %p454 = pnand %p452, %p453
      %p455 = pneg %p454
      // Predicated region
      $region76: #{tpu_custom_call.1} parent=5 // pred_check
        _
      $region77: #{tpu_custom_call.1} parent=5 // pred_check_branch
        %457 = sbr.rel (%p454) target = $region79
      $region78: #{tpu_custom_call.1} parent=5 // pred_region
        %s458 = ssub.s32 %s24, 1
        %s459 = sand.u32 %s51, 1
        %s460 = sand.u32 %s51, 1
        %s461 = smul.addr %s460, 64
        %s462 = scalar_lea.vmem [#allocation2], %s461
        // Predicated region
        $region80: #{tpu_custom_call.1} parent=78 // pred_check
          %p463 = pneg %p64
        $region81: #{tpu_custom_call.1} parent=78 // pred_check_branch
          %465 = sbr.rel (%p463) target = $region83
        $region82: #{tpu_custom_call.1} parent=78 // pred_region
          _
        $region83: #{tpu_custom_call.1} parent=78 // pred_fallthru
          _
        %s466 = sand.u32 %s79, 1
        %s467 = scalar_lea.sflag [#allocation4], %s466
        %s468 = sand.u32 %s79, 1
        %s469 = smul.addr %s468, 64
        %s470 = scalar_lea.vmem [#allocation3], %s469
        // Predicated region
        $region84: #{tpu_custom_call.1} parent=78 // pred_check
          %p471 = pneg %p92
        $region85: #{tpu_custom_call.1} parent=78 // pred_check_branch
          %473 = sbr.rel (%p471) target = $region87
        $region86: #{tpu_custom_call.1} parent=78 // pred_region
          %474 = dma.done %s467, 1024
        $region87: #{tpu_custom_call.1} parent=78 // pred_fallthru
          _
        // Predicated region
        $region88: #{tpu_custom_call.1} parent=78 // pred_check
          %p475 = pneg %p113
        $region89: #{tpu_custom_call.1} parent=78 // pred_check_branch
          %477 = sbr.rel (%p475) target = $region91
        $region90: #{tpu_custom_call.1} parent=78 // pred_region
          %478 = dma.done [#allocation7], 512
        $region91: #{tpu_custom_call.1} parent=78 // pred_fallthru
          _
        // Predicated region
        $region92: #{tpu_custom_call.1} parent=78 // pred_check
          %p479 = pneg %p155
        $region93: #{tpu_custom_call.1} parent=78 // pred_check_branch
          %481 = sbr.rel (%p479) target = $region95
        $region94: #{tpu_custom_call.1} parent=78 // pred_region
          %482 = dma.done [#allocation7], 512
        $region95: #{tpu_custom_call.1} parent=78 // pred_fallthru
          _
        // Predicated region
        $region96: #{tpu_custom_call.1} parent=78 // pred_check
          %p483 = pneg %p197
        $region97: #{tpu_custom_call.1} parent=78 // pred_check_branch
          %485 = sbr.rel (%p483) target = $region99
        $region98: #{tpu_custom_call.1} parent=78 // pred_region
          %486 = dma.done [#allocation10], 512
        $region99: #{tpu_custom_call.1} parent=78 // pred_fallthru
          _
        %s487 = sand.u32 %s51, 1
        %s488 = sand.u32 %s51, 1
        %s489 = smul.addr %s488, 64
        %s490 = scalar_lea.vmem [#allocation2], %s489
        %p491 = pneg %p64
        %p492 = pneg %p61
        %s493 = sand.u32 %s79, 1
        %s494 = scalar_lea.sflag [#allocation4], %s493
        %s495 = sand.u32 %s79, 1
        %s496 = smul.addr %s495, 64
        %s497 = scalar_lea.vmem [#allocation3], %s496
        %p498 = pneg %p92
        %p499 = pneg %p89
        %p500 = pneg %p113
        %p501 = pneg %p110
        %p502 = pneg %p134
        %p503 = pneg %p131
        %p504 = pneg %p155
        %p505 = pneg %p152
        %p506 = pneg %p176
        %p507 = pneg %p173
        %p508 = pneg %p197
        %p509 = pneg %p194
        %p510 = pneg %p218
        %p511 = pneg %p215
        %p512 = pneg %p239
        %p513 = pneg %p236
        %p514 = pneg %p260
        %p515 = pneg %p257
        %p516 = pneg %p288
        %p517 = pneg %p285
        %s518 = sand.u32 %s275, 1
        %s519 = scalar_lea.sflag [#allocation5], %s518
        %s520 = sand.u32 %s275, 1
        %s521 = smul.addr %s520, 64
        %s522 = scalar_lea.vmem [#allocation11], %s521
        %s523 = smul.u32 2, %s34
        %s524 = smul.u32 2, %s34
        %s525 = smul.u32 2, %s34
        %v526 = vld [vmem:[%s462] sm:$0xff]
        %v527 = vld [vmem:[%s462 + $0x8] sm:$0xff]
        %v528 = vld [vmem:[%s462 + $0x10] sm:$0xff]
        %v529 = vld [vmem:[%s462 + $0x18] sm:$0xff]
        %s530 = scalar_lea.vmem %s462, 32 [#allocation2]
        %v531 = vld [vmem:[%s530] sm:$0xff]
        %v532 = vld [vmem:[%s530 + $0x8] sm:$0xff]
        %v533 = vld [vmem:[%s530 + $0x10] sm:$0xff]
        %v534 = vld [vmem:[%s530 + $0x18] sm:$0xff]
        %v535 = vld [vmem:[%s470] sm:$0xff]
        %v536 = vld [vmem:[%s470 + $0x8] sm:$0xff]
        %v537 = vld [vmem:[%s470 + $0x10] sm:$0xff]
        %v538 = vld [vmem:[%s470 + $0x18] sm:$0xff]
        %s539 = scalar_lea.vmem %s470, 32 [#allocation3]
        %v540 = vld [vmem:[%s539] sm:$0xff]
        %v541 = vld [vmem:[%s539 + $0x8] sm:$0xff]
        %v542 = vld [vmem:[%s539 + $0x10] sm:$0xff]
        %v543 = vld [vmem:[%s539 + $0x18] sm:$0xff]
        %v544 = vld [vmem:[#allocation6] sm:$0xff]
        %v545 = vld [vmem:[#allocation6 + $0x8] sm:$0xff]
        %s546 = scalar_lea.vmem [#allocation6], 16
        %v547 = vld [vmem:[%s546] sm:$0xff]
        %v548 = vld [vmem:[%s546 + $0x8] sm:$0xff]
        %v549 = vld [vmem:[%s3] sm:$0xff]
        %v550 = vld [vmem:[%s3 + $0x8] sm:$0xff]
        %s551 = scalar_lea.vmem %s3, 16
        %v552 = vld [vmem:[%s551] sm:$0xff]
        %v553 = vld [vmem:[%s551 + $0x8] sm:$0xff]
        %v554 = vld [vmem:[#allocation8] sm:$0xff]
        %v555 = vld [vmem:[#allocation8 + $0x8] sm:$0xff]
        %s556 = scalar_lea.vmem [#allocation8], 16
        %v557 = vld [vmem:[%s556] sm:$0xff]
        %v558 = vld [vmem:[%s556 + $0x8] sm:$0xff]
        %v559 = vld [vmem:[%s5] sm:$0xff]
        %v560 = vld [vmem:[%s5 + $0x8] sm:$0xff]
        %s561 = scalar_lea.vmem %s5, 16
        %v562 = vld [vmem:[%s561] sm:$0xff]
        %v563 = vld [vmem:[%s561 + $0x8] sm:$0xff]
        %564 = vxpose.xlu0.b32.start [1/16] %v544, 128
        %565 = vxpose.xlu0.b32.cont [2/16] %v545, 128
        %566 = vxpose.xlu0.b32.cont [3/16] 0.0, 128
        %567 = vxpose.xlu0.b32.cont [4/16] 0.0, 128
        %568 = vxpose.xlu0.b32.cont [5/16] 0.0, 128
        %569 = vxpose.xlu0.b32.cont [6/16] 0.0, 128
        %570 = vxpose.xlu0.b32.cont [7/16] 0.0, 128
        %571 = vxpose.xlu0.b32.cont [8/16] 0.0, 128
        %572 = vxpose.xlu0.b32.cont [9/16] 0.0, 128
        %573 = vxpose.xlu0.b32.cont [10/16] 0.0, 128
        %574 = vxpose.xlu0.b32.cont [11/16] 0.0, 128
        %575 = vxpose.xlu0.b32.cont [12/16] 0.0, 128
        %576 = vxpose.xlu0.b32.cont [13/16] 0.0, 128
        %577 = vxpose.xlu0.b32.cont [14/16] 0.0, 128
        %578 = vxpose.xlu0.b32.cont [15/16] 0.0, 128
        %579 = vxpose.xlu0.b32.end [16/16] 0.0, 128
        %v580 = vpop.trf.xlu0
        %v581 = vpop.trf.xlu0
        %v582 = vpop.trf.xlu0
        %v583 = vpop.trf.xlu0
        %v584 = vpop.trf.xlu0
        %v585 = vpop.trf.xlu0
        %v586 = vpop.trf.xlu0
        %v587 = vpop.trf.xlu0
        %v588 = vpop.trf.xlu0
        %v589 = vpop.trf.xlu0
        %v590 = vpop.trf.xlu0
        %v591 = vpop.trf.xlu0
        %v592 = vpop.trf.xlu0
        %v593 = vpop.trf.xlu0
        %v594 = vpop.trf.xlu0
        %v595 = vpop.trf.xlu0
        %vm596 = vcmask 130048
        %v598 = vsel %vm596, %v580, 0
        %v601 = vsel %vm596, %v581, 0
        %603 = vmatprep.subr.mxu0 %v527
        %604 = vmatpush1.msra.mxu0 %v526
        %605 = vmatprep.subr.mxu0 %v529
        %606 = vmatpush1.msra.mxu0 %v528
        %607 = vmatprep.subr.mxu0 0.0
        %608 = vmatpush1.msra.mxu0 0.0
        %609 = vmatprep.subr.mxu0 0.0
        %610 = vmatpush1.msra.mxu0 0.0
        %611 = vmatprep.subr.mxu0 0.0
        %612 = vmatpush1.msra.mxu0 0.0
        %613 = vmatprep.subr.mxu0 0.0
        %614 = vmatpush1.msra.mxu0 0.0
        %615 = vmatprep.subr.mxu0 0.0
        %616 = vmatpush1.msra.mxu0 0.0
        %617 = vmatprep.subr.mxu0 0.0
        %618 = vmatpush1.msra.mxu0 0.0
        %619 = vmatprep.subr.mxu0 0.0
        %620 = vmatpush1.msra.mxu0 0.0
        %621 = vmatprep.subr.mxu0 0.0
        %622 = vmatpush1.msra.mxu0 0.0
        %623 = vmatprep.subr.mxu0 0.0
        %624 = vmatpush1.msra.mxu0 0.0
        %625 = vmatprep.subr.mxu0 0.0
        %626 = vmatpush1.msra.mxu0 0.0
        %627 = vmatprep.subr.mxu0 0.0
        %628 = vmatpush1.msra.mxu0 0.0
        %629 = vmatprep.subr.mxu0 0.0
        %630 = vmatpush1.msra.mxu0 0.0
        %631 = vmatprep.subr.mxu0 0.0
        %632 = vmatpush1.msra.mxu0 0.0
        %633 = vmatprep.subr.mxu0 0.0
        %634 = vmatpush1.msra.mxu0 0.0
        %635 = vmatprep.subr.mxu0 0.0
        %636 = vmatpush1.msra.mxu0 0.0
        %637 = vmatprep.subr.mxu0 0.0
        %638 = vmatpush1.msra.mxu0 0.0
        %639 = vmatprep.subr.mxu0 0.0
        %640 = vmatpush1.msra.mxu0 0.0
        %641 = vmatprep.subr.mxu0 0.0
        %642 = vmatpush1.msra.mxu0 0.0
        %643 = vmatprep.subr.mxu0 0.0
        %644 = vmatpush1.msra.mxu0 0.0
        %645 = vmatprep.subr.mxu0 0.0
        %646 = vmatpush1.msra.mxu0 0.0
        %647 = vmatprep.subr.mxu0 0.0
        %648 = vmatpush1.msra.mxu0 0.0
        %649 = vmatprep.subr.mxu0 0.0
        %650 = vmatpush1.msra.mxu0 0.0
        %651 = vmatprep.subr.mxu0 0.0
        %652 = vmatpush1.msra.mxu0 0.0
        %653 = vmatprep.subr.mxu0 0.0
        %654 = vmatpush1.msra.mxu0 0.0
        %655 = vmatprep.subr.mxu0 0.0
        %656 = vmatpush1.msra.mxu0 0.0
        %657 = vmatprep.subr.mxu0 0.0
        %658 = vmatpush1.msra.mxu0 0.0
        %659 = vmatprep.subr.mxu0 0.0
        %660 = vmatpush1.msra.mxu0 0.0
        %661 = vmatprep.subr.mxu0 0.0
        %662 = vmatpush1.msra.mxu0 0.0
        %663 = vmatprep.subr.mxu0 0.0
        %664 = vmatpush1.msra.mxu0 0.0
        %665 = vmatprep.subr.mxu0 0.0
        %666 = vmatpush1.msra.mxu0 0.0
        %667 = vmatprep.mubr.f32.mxu0 0.0
        %668 = vmatmul.mubr.f32.gmra.mrb[0].mxu0 %v598
        %v669 = vpop.f32.mrb[0].mxu0
        %v670 = vadd.f32 0.0, %v669
        %v671 = vpop.f32.mrb[0].mxu0
        %v672 = vadd.f32 0.0, %v671
        %673 = vmatprep.mubr.f32.mxu0 0.0
        %674 = vmatmul.mubr.f32.gmra.mrb[0].mxu0 %v601
        %v675 = vpop.f32.mrb[0].mxu0
        %v676 = vadd.f32 0.0, %v675
        %v677 = vpop.f32.mrb[0].mxu0
        %v678 = vadd.f32 0.0, %v677
        %679 = vdwg.mxu0
        %680 = vxpose.xlu0.b32.start [1/16] %v547, 128
        %681 = vxpose.xlu0.b32.cont [2/16] %v548, 128
        %682 = vxpose.xlu0.b32.cont [3/16] 0.0, 128
        %683 = vxpose.xlu0.b32.cont [4/16] 0.0, 128
        %684 = vxpose.xlu0.b32.cont [5/16] 0.0, 128
        %685 = vxpose.xlu0.b32.cont [6/16] 0.0, 128
        %686 = vxpose.xlu0.b32.cont [7/16] 0.0, 128
        %687 = vxpose.xlu0.b32.cont [8/16] 0.0, 128
        %688 = vxpose.xlu0.b32.cont [9/16] 0.0, 128
        %689 = vxpose.xlu0.b32.cont [10/16] 0.0, 128
        %690 = vxpose.xlu0.b32.cont [11/16] 0.0, 128
        %691 = vxpose.xlu0.b32.cont [12/16] 0.0, 128
        %692 = vxpose.xlu0.b32.cont [13/16] 0.0, 128
        %693 = vxpose.xlu0.b32.cont [14/16] 0.0, 128
        %694 = vxpose.xlu0.b32.cont [15/16] 0.0, 128
        %695 = vxpose.xlu0.b32.end [16/16] 0.0, 128
        %v696 = vpop.trf.xlu0
        %v697 = vpop.trf.xlu0
        %v698 = vpop.trf.xlu0
        %v699 = vpop.trf.xlu0
        %v700 = vpop.trf.xlu0
        %v701 = vpop.trf.xlu0
        %v702 = vpop.trf.xlu0
        %v703 = vpop.trf.xlu0
        %v704 = vpop.trf.xlu0
        %v705 = vpop.trf.xlu0
        %v706 = vpop.trf.xlu0
        %v707 = vpop.trf.xlu0
        %v708 = vpop.trf.xlu0
        %v709 = vpop.trf.xlu0
        %v710 = vpop.trf.xlu0
        %v711 = vpop.trf.xlu0
        %v713 = vsel %vm596, %v696, 0
        %v716 = vsel %vm596, %v697, 0
        %718 = vmatprep.subr.mxu0 %v532
        %719 = vmatpush1.msra.mxu0 %v531
        %720 = vmatprep.subr.mxu0 %v534
        %721 = vmatpush1.msra.mxu0 %v533
        %722 = vmatprep.subr.mxu0 0.0
        %723 = vmatpush1.msra.mxu0 0.0
        %724 = vmatprep.subr.mxu0 0.0
        %725 = vmatpush1.msra.mxu0 0.0
        %726 = vmatprep.subr.mxu0 0.0
        %727 = vmatpush1.msra.mxu0 0.0
        %728 = vmatprep.subr.mxu0 0.0
        %729 = vmatpush1.msra.mxu0 0.0
        %730 = vmatprep.subr.mxu0 0.0
        %731 = vmatpush1.msra.mxu0 0.0
        %732 = vmatprep.subr.mxu0 0.0
        %733 = vmatpush1.msra.mxu0 0.0
        %734 = vmatprep.subr.mxu0 0.0
        %735 = vmatpush1.msra.mxu0 0.0
        %736 = vmatprep.subr.mxu0 0.0
        %737 = vmatpush1.msra.mxu0 0.0
        %738 = vmatprep.subr.mxu0 0.0
        %739 = vmatpush1.msra.mxu0 0.0
        %740 = vmatprep.subr.mxu0 0.0
        %741 = vmatpush1.msra.mxu0 0.0
        %742 = vmatprep.subr.mxu0 0.0
        %743 = vmatpush1.msra.mxu0 0.0
        %744 = vmatprep.subr.mxu0 0.0
        %745 = vmatpush1.msra.mxu0 0.0
        %746 = vmatprep.subr.mxu0 0.0
        %747 = vmatpush1.msra.mxu0 0.0
        %748 = vmatprep.subr.mxu0 0.0
        %749 = vmatpush1.msra.mxu0 0.0
        %750 = vmatprep.subr.mxu0 0.0
        %751 = vmatpush1.msra.mxu0 0.0
        %752 = vmatprep.subr.mxu0 0.0
        %753 = vmatpush1.msra.mxu0 0.0
        %754 = vmatprep.subr.mxu0 0.0
        %755 = vmatpush1.msra.mxu0 0.0
        %756 = vmatprep.subr.mxu0 0.0
        %757 = vmatpush1.msra.mxu0 0.0
        %758 = vmatprep.subr.mxu0 0.0
        %759 = vmatpush1.msra.mxu0 0.0
        %760 = vmatprep.subr.mxu0 0.0
        %761 = vmatpush1.msra.mxu0 0.0
        %762 = vmatprep.subr.mxu0 0.0
        %763 = vmatpush1.msra.mxu0 0.0
        %764 = vmatprep.subr.mxu0 0.0
        %765 = vmatpush1.msra.mxu0 0.0
        %766 = vmatprep.subr.mxu0 0.0
        %767 = vmatpush1.msra.mxu0 0.0
        %768 = vmatprep.subr.mxu0 0.0
        %769 = vmatpush1.msra.mxu0 0.0
        %770 = vmatprep.subr.mxu0 0.0
        %771 = vmatpush1.msra.mxu0 0.0
        %772 = vmatprep.subr.mxu0 0.0
        %773 = vmatpush1.msra.mxu0 0.0
        %774 = vmatprep.subr.mxu0 0.0
        %775 = vmatpush1.msra.mxu0 0.0
        %776 = vmatprep.subr.mxu0 0.0
        %777 = vmatpush1.msra.mxu0 0.0
        %778 = vmatprep.subr.mxu0 0.0
        %779 = vmatpush1.msra.mxu0 0.0
        %780 = vmatprep.subr.mxu0 0.0
        %781 = vmatpush1.msra.mxu0 0.0
        %782 = vmatprep.mubr.f32.mxu0 0.0
        %783 = vmatmul.mubr.f32.gmra.mrb[0].mxu0 %v713
        %v784 = vpop.f32.mrb[0].mxu0
        %v785 = vadd.f32 0.0, %v784
        %v786 = vpop.f32.mrb[0].mxu0
        %v787 = vadd.f32 0.0, %v786
        %788 = vmatprep.mubr.f32.mxu0 0.0
        %789 = vmatmul.mubr.f32.gmra.mrb[0].mxu0 %v716
        %v790 = vpop.f32.mrb[0].mxu0
        %v791 = vadd.f32 0.0, %v790
        %v792 = vpop.f32.mrb[0].mxu0
        %v793 = vadd.f32 0.0, %v792
        %794 = vdwg.mxu0
        %v795 = vsub.f32 %v670, %v785
        %v796 = vsub.f32 %v672, %v787
        %v797 = vsub.f32 %v676, %v791
        %v798 = vsub.f32 %v678, %v793
        %800 = vset.pattern.permute.xlu0 0
        %801 = vperm.xlu0 %800, %v549
        %v802 = vpop.permute.xlu0 %801
        %805 = vset.pattern.permute.xlu0 0
        %806 = vperm.xlu0 %805, %v550
        %v807 = vpop.permute.xlu0 %806
        %v809 = vadd.f32 %v795, %v802
        %v810 = vadd.f32 %v796, %v802
        %v811 = vadd.f32 %v797, %v807
        %v812 = vadd.f32 %v798, %v807
        %v813 = vmax.f32 %v809, 0.0
        %v814 = vmax.f32 %v810, 0.0
        %v815 = vmax.f32 %v811, 0.0
        %v816 = vmax.f32 %v812, 0.0
        %817 = vmatprep.subr.mxu0 %v527
        %818 = vmatpush1.msra.mxu0 %v526
        %819 = vmatprep.subr.mxu0 %v529
        %820 = vmatpush1.msra.mxu0 %v528
        %821 = vmatprep.subr.mxu0 0.0
        %822 = vmatpush1.msra.mxu0 0.0
        %823 = vmatprep.subr.mxu0 0.0
        %824 = vmatpush1.msra.mxu0 0.0
        %825 = vmatprep.subr.mxu0 0.0
        %826 = vmatpush1.msra.mxu0 0.0
        %827 = vmatprep.subr.mxu0 0.0
        %828 = vmatpush1.msra.mxu0 0.0
        %829 = vmatprep.subr.mxu0 0.0
        %830 = vmatpush1.msra.mxu0 0.0
        %831 = vmatprep.subr.mxu0 0.0
        %832 = vmatpush1.msra.mxu0 0.0
        %833 = vmatprep.subr.mxu0 0.0
        %834 = vmatpush1.msra.mxu0 0.0
        %835 = vmatprep.subr.mxu0 0.0
        %836 = vmatpush1.msra.mxu0 0.0
        %837 = vmatprep.subr.mxu0 0.0
        %838 = vmatpush1.msra.mxu0 0.0
        %839 = vmatprep.subr.mxu0 0.0
        %840 = vmatpush1.msra.mxu0 0.0
        %841 = vmatprep.subr.mxu0 0.0
        %842 = vmatpush1.msra.mxu0 0.0
        %843 = vmatprep.subr.mxu0 0.0
        %844 = vmatpush1.msra.mxu0 0.0
        %845 = vmatprep.subr.mxu0 0.0
        %846 = vmatpush1.msra.mxu0 0.0
        %847 = vmatprep.subr.mxu0 0.0
        %848 = vmatpush1.msra.mxu0 0.0
        %849 = vmatprep.subr.mxu0 0.0
        %850 = vmatpush1.msra.mxu0 0.0
        %851 = vmatprep.subr.mxu0 0.0
        %852 = vmatpush1.msra.mxu0 0.0
        %853 = vmatprep.subr.mxu0 0.0
        %854 = vmatpush1.msra.mxu0 0.0
        %855 = vmatprep.subr.mxu0 0.0
        %856 = vmatpush1.msra.mxu0 0.0
        %857 = vmatprep.subr.mxu0 0.0
        %858 = vmatpush1.msra.mxu0 0.0
        %859 = vmatprep.subr.mxu0 0.0
        %860 = vmatpush1.msra.mxu0 0.0
        %861 = vmatprep.subr.mxu0 0.0
        %862 = vmatpush1.msra.mxu0 0.0
        %863 = vmatprep.subr.mxu0 0.0
        %864 = vmatpush1.msra.mxu0 0.0
        %865 = vmatprep.subr.mxu0 0.0
        %866 = vmatpush1.msra.mxu0 0.0
        %867 = vmatprep.subr.mxu0 0.0
        %868 = vmatpush1.msra.mxu0 0.0
        %869 = vmatprep.subr.mxu0 0.0
        %870 = vmatpush1.msra.mxu0 0.0
        %871 = vmatprep.subr.mxu0 0.0
        %872 = vmatpush1.msra.mxu0 0.0
        %873 = vmatprep.subr.mxu0 0.0
        %874 = vmatpush1.msra.mxu0 0.0
        %875 = vmatprep.subr.mxu0 0.0
        %876 = vmatpush1.msra.mxu0 0.0
        %877 = vmatprep.subr.mxu0 0.0
        %878 = vmatpush1.msra.mxu0 0.0
        %879 = vmatprep.subr.mxu0 0.0
        %880 = vmatpush1.msra.mxu0 0.0
        %881 = vmatprep.mubr.f32.mxu0 0.0
        %882 = vmatmul.mubr.f32.gmra.mrb[0].mxu0 %v713
        %v883 = vpop.f32.mrb[0].mxu0
        %v884 = vadd.f32 0.0, %v883
        %v885 = vpop.f32.mrb[0].mxu0
        %v886 = vadd.f32 0.0, %v885
        %887 = vmatprep.mubr.f32.mxu0 0.0
        %888 = vmatmul.mubr.f32.gmra.mrb[0].mxu0 %v716
        %v889 = vpop.f32.mrb[0].mxu0
        %v890 = vadd.f32 0.0, %v889
        %v891 = vpop.f32.mrb[0].mxu0
        %v892 = vadd.f32 0.0, %v891
        %893 = vdwg.mxu0
        %894 = vmatprep.subr.mxu0 %v532
        %895 = vmatpush1.msra.mxu0 %v531
        %896 = vmatprep.subr.mxu0 %v534
        %897 = vmatpush1.msra.mxu0 %v533
        %898 = vmatprep.subr.mxu0 0.0
        %899 = vmatpush1.msra.mxu0 0.0
        %900 = vmatprep.subr.mxu0 0.0
        %901 = vmatpush1.msra.mxu0 0.0
        %902 = vmatprep.subr.mxu0 0.0
        %903 = vmatpush1.msra.mxu0 0.0
        %904 = vmatprep.subr.mxu0 0.0
        %905 = vmatpush1.msra.mxu0 0.0
        %906 = vmatprep.subr.mxu0 0.0
        %907 = vmatpush1.msra.mxu0 0.0
        %908 = vmatprep.subr.mxu0 0.0
        %909 = vmatpush1.msra.mxu0 0.0
        %910 = vmatprep.subr.mxu0 0.0
        %911 = vmatpush1.msra.mxu0 0.0
        %912 = vmatprep.subr.mxu0 0.0
        %913 = vmatpush1.msra.mxu0 0.0
        %914 = vmatprep.subr.mxu0 0.0
        %915 = vmatpush1.msra.mxu0 0.0
        %916 = vmatprep.subr.mxu0 0.0
        %917 = vmatpush1.msra.mxu0 0.0
        %918 = vmatprep.subr.mxu0 0.0
        %919 = vmatpush1.msra.mxu0 0.0
        %920 = vmatprep.subr.mxu0 0.0
        %921 = vmatpush1.msra.mxu0 0.0
        %922 = vmatprep.subr.mxu0 0.0
        %923 = vmatpush1.msra.mxu0 0.0
        %924 = vmatprep.subr.mxu0 0.0
        %925 = vmatpush1.msra.mxu0 0.0
        %926 = vmatprep.subr.mxu0 0.0
        %927 = vmatpush1.msra.mxu0 0.0
        %928 = vmatprep.subr.mxu0 0.0
        %929 = vmatpush1.msra.mxu0 0.0
        %930 = vmatprep.subr.mxu0 0.0
        %931 = vmatpush1.msra.mxu0 0.0
        %932 = vmatprep.subr.mxu0 0.0
        %933 = vmatpush1.msra.mxu0 0.0
        %934 = vmatprep.subr.mxu0 0.0
        %935 = vmatpush1.msra.mxu0 0.0
        %936 = vmatprep.subr.mxu0 0.0
        %937 = vmatpush1.msra.mxu0 0.0
        %938 = vmatprep.subr.mxu0 0.0
        %939 = vmatpush1.msra.mxu0 0.0
        %940 = vmatprep.subr.mxu0 0.0
        %941 = vmatpush1.msra.mxu0 0.0
        %942 = vmatprep.subr.mxu0 0.0
        %943 = vmatpush1.msra.mxu0 0.0
        %944 = vmatprep.subr.mxu0 0.0
        %945 = vmatpush1.msra.mxu0 0.0
        %946 = vmatprep.subr.mxu0 0.0
        %947 = vmatpush1.msra.mxu0 0.0
        %948 = vmatprep.subr.mxu0 0.0
        %949 = vmatpush1.msra.mxu0 0.0
        %950 = vmatprep.subr.mxu0 0.0
        %951 = vmatpush1.msra.mxu0 0.0
        %952 = vmatprep.subr.mxu0 0.0
        %953 = vmatpush1.msra.mxu0 0.0
        %954 = vmatprep.subr.mxu0 0.0
        %955 = vmatpush1.msra.mxu0 0.0
        %956 = vmatprep.subr.mxu0 0.0
        %957 = vmatpush1.msra.mxu0 0.0
        %958 = vmatprep.mubr.f32.mxu0 0.0
        %959 = vmatmul.mubr.f32.gmra.mrb[0].mxu0 %v598
        %v960 = vpop.f32.mrb[0].mxu0
        %v961 = vadd.f32 %v884, %v960
        %v962 = vpop.f32.mrb[0].mxu0
        %v963 = vadd.f32 %v886, %v962
        %964 = vmatprep.mubr.f32.mxu0 0.0
        %965 = vmatmul.mubr.f32.gmra.mrb[0].mxu0 %v601
        %v966 = vpop.f32.mrb[0].mxu0
        %v967 = vadd.f32 %v890, %v966
        %v968 = vpop.f32.mrb[0].mxu0
        %v969 = vadd.f32 %v892, %v968
        %970 = vdwg.mxu0
        %972 = vset.pattern.permute.xlu0 0
        %973 = vperm.xlu0 %972, %v552
        %v974 = vpop.permute.xlu0 %973
        %977 = vset.pattern.permute.xlu0 0
        %978 = vperm.xlu0 %977, %v553
        %v979 = vpop.permute.xlu0 %978
        %v981 = vadd.f32 %v961, %v974
        %v982 = vadd.f32 %v963, %v974
        %v983 = vadd.f32 %v967, %v979
        %v984 = vadd.f32 %v969, %v979
        %v985 = vmax.f32 %v981, 0.0
        %v986 = vmax.f32 %v982, 0.0
        %v987 = vmax.f32 %v983, 0.0
        %v988 = vmax.f32 %v984, 0.0
        %989 = vxpose.xlu0.b32.start [1/16] %v554, 128
        %990 = vxpose.xlu0.b32.cont [2/16] %v555, 128
        %991 = vxpose.xlu0.b32.cont [3/16] 0.0, 128
        %992 = vxpose.xlu0.b32.cont [4/16] 0.0, 128
        %993 = vxpose.xlu0.b32.cont [5/16] 0.0, 128
        %994 = vxpose.xlu0.b32.cont [6/16] 0.0, 128
        %995 = vxpose.xlu0.b32.cont [7/16] 0.0, 128
        %996 = vxpose.xlu0.b32.cont [8/16] 0.0, 128
        %997 = vxpose.xlu0.b32.cont [9/16] 0.0, 128
        %998 = vxpose.xlu0.b32.cont [10/16] 0.0, 128
        %999 = vxpose.xlu0.b32.cont [11/16] 0.0, 128
        %1000 = vxpose.xlu0.b32.cont [12/16] 0.0, 128
        %1001 = vxpose.xlu0.b32.cont [13/16] 0.0, 128
        %1002 = vxpose.xlu0.b32.cont [14/16] 0.0, 128
        %1003 = vxpose.xlu0.b32.cont [15/16] 0.0, 128
        %1004 = vxpose.xlu0.b32.end [16/16] 0.0, 128
        %v1005 = vpop.trf.xlu0
        %v1006 = vpop.trf.xlu0
        %v1007 = vpop.trf.xlu0
        %v1008 = vpop.trf.xlu0
        %v1009 = vpop.trf.xlu0
        %v1010 = vpop.trf.xlu0
        %v1011 = vpop.trf.xlu0
        %v1012 = vpop.trf.xlu0
        %v1013 = vpop.trf.xlu0
        %v1014 = vpop.trf.xlu0
        %v1015 = vpop.trf.xlu0
        %v1016 = vpop.trf.xlu0
        %v1017 = vpop.trf.xlu0
        %v1018 = vpop.trf.xlu0
        %v1019 = vpop.trf.xlu0
        %v1020 = vpop.trf.xlu0
        %v1022 = vsel %vm596, %v1005, 0
        %v1025 = vsel %vm596, %v1006, 0
        %1027 = vmatprep.subr.mxu0 %v814
        %1028 = vmatpush1.msra.mxu0 %v813
        %1029 = vmatprep.subr.mxu0 %v816
        %1030 = vmatpush1.msra.mxu0 %v815
        %1031 = vmatprep.subr.mxu0 0.0
        %1032 = vmatpush1.msra.mxu0 0.0
        %1033 = vmatprep.subr.mxu0 0.0
        %1034 = vmatpush1.msra.mxu0 0.0
        %1035 = vmatprep.subr.mxu0 0.0
        %1036 = vmatpush1.msra.mxu0 0.0
        %1037 = vmatprep.subr.mxu0 0.0
        %1038 = vmatpush1.msra.mxu0 0.0
        %1039 = vmatprep.subr.mxu0 0.0
        %1040 = vmatpush1.msra.mxu0 0.0
        %1041 = vmatprep.subr.mxu0 0.0
        %1042 = vmatpush1.msra.mxu0 0.0
        %1043 = vmatprep.subr.mxu0 0.0
        %1044 = vmatpush1.msra.mxu0 0.0
        %1045 = vmatprep.subr.mxu0 0.0
        %1046 = vmatpush1.msra.mxu0 0.0
        %1047 = vmatprep.subr.mxu0 0.0
        %1048 = vmatpush1.msra.mxu0 0.0
        %1049 = vmatprep.subr.mxu0 0.0
        %1050 = vmatpush1.msra.mxu0 0.0
        %1051 = vmatprep.subr.mxu0 0.0
        %1052 = vmatpush1.msra.mxu0 0.0
        %1053 = vmatprep.subr.mxu0 0.0
        %1054 = vmatpush1.msra.mxu0 0.0
        %1055 = vmatprep.subr.mxu0 0.0
        %1056 = vmatpush1.msra.mxu0 0.0
        %1057 = vmatprep.subr.mxu0 0.0
        %1058 = vmatpush1.msra.mxu0 0.0
        %1059 = vmatprep.subr.mxu0 0.0
        %1060 = vmatpush1.msra.mxu0 0.0
        %1061 = vmatprep.subr.mxu0 0.0
        %1062 = vmatpush1.msra.mxu0 0.0
        %1063 = vmatprep.subr.mxu0 0.0
        %1064 = vmatpush1.msra.mxu0 0.0
        %1065 = vmatprep.subr.mxu0 0.0
        %1066 = vmatpush1.msra.mxu0 0.0
        %1067 = vmatprep.subr.mxu0 0.0
        %1068 = vmatpush1.msra.mxu0 0.0
        %1069 = vmatprep.subr.mxu0 0.0
        %1070 = vmatpush1.msra.mxu0 0.0
        %1071 = vmatprep.subr.mxu0 0.0
        %1072 = vmatpush1.msra.mxu0 0.0
        %1073 = vmatprep.subr.mxu0 0.0
        %1074 = vmatpush1.msra.mxu0 0.0
        %1075 = vmatprep.subr.mxu0 0.0
        %1076 = vmatpush1.msra.mxu0 0.0
        %1077 = vmatprep.subr.mxu0 0.0
        %1078 = vmatpush1.msra.mxu0 0.0
        %1079 = vmatprep.subr.mxu0 0.0
        %1080 = vmatpush1.msra.mxu0 0.0
        %1081 = vmatprep.subr.mxu0 0.0
        %1082 = vmatpush1.msra.mxu0 0.0
        %1083 = vmatprep.subr.mxu0 0.0
        %1084 = vmatpush1.msra.mxu0 0.0
        %1085 = vmatprep.subr.mxu0 0.0
        %1086 = vmatpush1.msra.mxu0 0.0
        %1087 = vmatprep.subr.mxu0 0.0
        %1088 = vmatpush1.msra.mxu0 0.0
        %1089 = vmatprep.subr.mxu0 0.0
        %1090 = vmatpush1.msra.mxu0 0.0
        %1091 = vmatprep.mubr.f32.mxu0 0.0
        %1092 = vmatmul.mubr.f32.gmra.mrb[0].mxu0 %v1022
        %v1093 = vpop.f32.mrb[0].mxu0
        %v1094 = vadd.f32 0.0, %v1093
        %v1095 = vpop.f32.mrb[0].mxu0
        %v1096 = vadd.f32 0.0, %v1095
        %1097 = vmatprep.mubr.f32.mxu0 0.0
        %1098 = vmatmul.mubr.f32.gmra.mrb[0].mxu0 %v1025
        %v1099 = vpop.f32.mrb[0].mxu0
        %v1100 = vadd.f32 0.0, %v1099
        %v1101 = vpop.f32.mrb[0].mxu0
        %v1102 = vadd.f32 0.0, %v1101
        %1103 = vdwg.mxu0
        %1104 = vxpose.xlu0.b32.start [1/16] %v557, 128
        %1105 = vxpose.xlu0.b32.cont [2/16] %v558, 128
        %1106 = vxpose.xlu0.b32.cont [3/16] 0.0, 128
        %1107 = vxpose.xlu0.b32.cont [4/16] 0.0, 128
        %1108 = vxpose.xlu0.b32.cont [5/16] 0.0, 128
        %1109 = vxpose.xlu0.b32.cont [6/16] 0.0, 128
        %1110 = vxpose.xlu0.b32.cont [7/16] 0.0, 128
        %1111 = vxpose.xlu0.b32.cont [8/16] 0.0, 128
        %1112 = vxpose.xlu0.b32.cont [9/16] 0.0, 128
        %1113 = vxpose.xlu0.b32.cont [10/16] 0.0, 128
        %1114 = vxpose.xlu0.b32.cont [11/16] 0.0, 128
        %1115 = vxpose.xlu0.b32.cont [12/16] 0.0, 128
        %1116 = vxpose.xlu0.b32.cont [13/16] 0.0, 128
        %1117 = vxpose.xlu0.b32.cont [14/16] 0.0, 128
        %1118 = vxpose.xlu0.b32.cont [15/16] 0.0, 128
        %1119 = vxpose.xlu0.b32.end [16/16] 0.0, 128
        %v1120 = vpop.trf.xlu0
        %v1121 = vpop.trf.xlu0
        %v1122 = vpop.trf.xlu0
        %v1123 = vpop.trf.xlu0
        %v1124 = vpop.trf.xlu0
        %v1125 = vpop.trf.xlu0
        %v1126 = vpop.trf.xlu0
        %v1127 = vpop.trf.xlu0
        %v1128 = vpop.trf.xlu0
        %v1129 = vpop.trf.xlu0
        %v1130 = vpop.trf.xlu0
        %v1131 = vpop.trf.xlu0
        %v1132 = vpop.trf.xlu0
        %v1133 = vpop.trf.xlu0
        %v1134 = vpop.trf.xlu0
        %v1135 = vpop.trf.xlu0
        %v1137 = vsel %vm596, %v1120, 0
        %v1140 = vsel %vm596, %v1121, 0
        %1142 = vmatprep.subr.mxu0 %v986
        %1143 = vmatpush1.msra.mxu0 %v985
        %1144 = vmatprep.subr.mxu0 %v988
        %1145 = vmatpush1.msra.mxu0 %v987
        %1146 = vmatprep.subr.mxu0 0.0
        %1147 = vmatpush1.msra.mxu0 0.0
        %1148 = vmatprep.subr.mxu0 0.0
        %1149 = vmatpush1.msra.mxu0 0.0
        %1150 = vmatprep.subr.mxu0 0.0
        %1151 = vmatpush1.msra.mxu0 0.0
        %1152 = vmatprep.subr.mxu0 0.0
        %1153 = vmatpush1.msra.mxu0 0.0
        %1154 = vmatprep.subr.mxu0 0.0
        %1155 = vmatpush1.msra.mxu0 0.0
        %1156 = vmatprep.subr.mxu0 0.0
        %1157 = vmatpush1.msra.mxu0 0.0
        %1158 = vmatprep.subr.mxu0 0.0
        %1159 = vmatpush1.msra.mxu0 0.0
        %1160 = vmatprep.subr.mxu0 0.0
        %1161 = vmatpush1.msra.mxu0 0.0
        %1162 = vmatprep.subr.mxu0 0.0
        %1163 = vmatpush1.msra.mxu0 0.0
        %1164 = vmatprep.subr.mxu0 0.0
        %1165 = vmatpush1.msra.mxu0 0.0
        %1166 = vmatprep.subr.mxu0 0.0
        %1167 = vmatpush1.msra.mxu0 0.0
        %1168 = vmatprep.subr.mxu0 0.0
        %1169 = vmatpush1.msra.mxu0 0.0
        %1170 = vmatprep.subr.mxu0 0.0
        %1171 = vmatpush1.msra.mxu0 0.0
        %1172 = vmatprep.subr.mxu0 0.0
        %1173 = vmatpush1.msra.mxu0 0.0
        %1174 = vmatprep.subr.mxu0 0.0
        %1175 = vmatpush1.msra.mxu0 0.0
        %1176 = vmatprep.subr.mxu0 0.0
        %1177 = vmatpush1.msra.mxu0 0.0
        %1178 = vmatprep.subr.mxu0 0.0
        %1179 = vmatpush1.msra.mxu0 0.0
        %1180 = vmatprep.subr.mxu0 0.0
        %1181 = vmatpush1.msra.mxu0 0.0
        %1182 = vmatprep.subr.mxu0 0.0
        %1183 = vmatpush1.msra.mxu0 0.0
        %1184 = vmatprep.subr.mxu0 0.0
        %1185 = vmatpush1.msra.mxu0 0.0
        %1186 = vmatprep.subr.mxu0 0.0
        %1187 = vmatpush1.msra.mxu0 0.0
        %1188 = vmatprep.subr.mxu0 0.0
        %1189 = vmatpush1.msra.mxu0 0.0
        %1190 = vmatprep.subr.mxu0 0.0
        %1191 = vmatpush1.msra.mxu0 0.0
        %1192 = vmatprep.subr.mxu0 0.0
        %1193 = vmatpush1.msra.mxu0 0.0
        %1194 = vmatprep.subr.mxu0 0.0
        %1195 = vmatpush1.msra.mxu0 0.0
        %1196 = vmatprep.subr.mxu0 0.0
        %1197 = vmatpush1.msra.mxu0 0.0
        %1198 = vmatprep.subr.mxu0 0.0
        %1199 = vmatpush1.msra.mxu0 0.0
        %1200 = vmatprep.subr.mxu0 0.0
        %1201 = vmatpush1.msra.mxu0 0.0
        %1202 = vmatprep.subr.mxu0 0.0
        %1203 = vmatpush1.msra.mxu0 0.0
        %1204 = vmatprep.subr.mxu0 0.0
        %1205 = vmatpush1.msra.mxu0 0.0
        %1206 = vmatprep.mubr.f32.mxu0 0.0
        %1207 = vmatmul.mubr.f32.gmra.mrb[0].mxu0 %v1137
        %v1208 = vpop.f32.mrb[0].mxu0
        %v1209 = vadd.f32 0.0, %v1208
        %v1210 = vpop.f32.mrb[0].mxu0
        %v1211 = vadd.f32 0.0, %v1210
        %1212 = vmatprep.mubr.f32.mxu0 0.0
        %1213 = vmatmul.mubr.f32.gmra.mrb[0].mxu0 %v1140
        %v1214 = vpop.f32.mrb[0].mxu0
        %v1215 = vadd.f32 0.0, %v1214
        %v1216 = vpop.f32.mrb[0].mxu0
        %v1217 = vadd.f32 0.0, %v1216
        %1218 = vdwg.mxu0
        %v1219 = vsub.f32 %v1094, %v1209
        %v1220 = vsub.f32 %v1096, %v1211
        %v1221 = vsub.f32 %v1100, %v1215
        %v1222 = vsub.f32 %v1102, %v1217
        %1224 = vset.pattern.permute.xlu0 0
        %1225 = vperm.xlu0 %1224, %v559
        %v1226 = vpop.permute.xlu0 %1225
        %1229 = vset.pattern.permute.xlu0 0
        %1230 = vperm.xlu0 %1229, %v560
        %v1231 = vpop.permute.xlu0 %1230
        %v1233 = vadd.f32 %v1219, %v1226
        %v1234 = vadd.f32 %v1220, %v1226
        %v1235 = vadd.f32 %v1221, %v1231
        %v1236 = vadd.f32 %v1222, %v1231
        %1237 = vmatprep.subr.mxu0 %v814
        %1238 = vmatpush1.msra.mxu0 %v813
        %1239 = vmatprep.subr.mxu0 %v816
        %1240 = vmatpush1.msra.mxu0 %v815
        %1241 = vmatprep.subr.mxu0 0.0
        %1242 = vmatpush1.msra.mxu0 0.0
        %1243 = vmatprep.subr.mxu0 0.0
        %1244 = vmatpush1.msra.mxu0 0.0
        %1245 = vmatprep.subr.mxu0 0.0
        %1246 = vmatpush1.msra.mxu0 0.0
        %1247 = vmatprep.subr.mxu0 0.0
        %1248 = vmatpush1.msra.mxu0 0.0
        %1249 = vmatprep.subr.mxu0 0.0
        %1250 = vmatpush1.msra.mxu0 0.0
        %1251 = vmatprep.subr.mxu0 0.0
        %1252 = vmatpush1.msra.mxu0 0.0
        %1253 = vmatprep.subr.mxu0 0.0
        %1254 = vmatpush1.msra.mxu0 0.0
        %1255 = vmatprep.subr.mxu0 0.0
        %1256 = vmatpush1.msra.mxu0 0.0
        %1257 = vmatprep.subr.mxu0 0.0
        %1258 = vmatpush1.msra.mxu0 0.0
        %1259 = vmatprep.subr.mxu0 0.0
        %1260 = vmatpush1.msra.mxu0 0.0
        %1261 = vmatprep.subr.mxu0 0.0
        %1262 = vmatpush1.msra.mxu0 0.0
        %1263 = vmatprep.subr.mxu0 0.0
        %1264 = vmatpush1.msra.mxu0 0.0
        %1265 = vmatprep.subr.mxu0 0.0
        %1266 = vmatpush1.msra.mxu0 0.0
        %1267 = vmatprep.subr.mxu0 0.0
        %1268 = vmatpush1.msra.mxu0 0.0
        %1269 = vmatprep.subr.mxu0 0.0
        %1270 = vmatpush1.msra.mxu0 0.0
        %1271 = vmatprep.subr.mxu0 0.0
        %1272 = vmatpush1.msra.mxu0 0.0
        %1273 = vmatprep.subr.mxu0 0.0
        %1274 = vmatpush1.msra.mxu0 0.0
        %1275 = vmatprep.subr.mxu0 0.0
        %1276 = vmatpush1.msra.mxu0 0.0
        %1277 = vmatprep.subr.mxu0 0.0
        %1278 = vmatpush1.msra.mxu0 0.0
        %1279 = vmatprep.subr.mxu0 0.0
        %1280 = vmatpush1.msra.mxu0 0.0
        %1281 = vmatprep.subr.mxu0 0.0
        %1282 = vmatpush1.msra.mxu0 0.0
        %1283 = vmatprep.subr.mxu0 0.0
        %1284 = vmatpush1.msra.mxu0 0.0
        %1285 = vmatprep.subr.mxu0 0.0
        %1286 = vmatpush1.msra.mxu0 0.0
        %1287 = vmatprep.subr.mxu0 0.0
        %1288 = vmatpush1.msra.mxu0 0.0
        %1289 = vmatprep.subr.mxu0 0.0
        %1290 = vmatpush1.msra.mxu0 0.0
        %1291 = vmatprep.subr.mxu0 0.0
        %1292 = vmatpush1.msra.mxu0 0.0
        %1293 = vmatprep.subr.mxu0 0.0
        %1294 = vmatpush1.msra.mxu0 0.0
        %1295 = vmatprep.subr.mxu0 0.0
        %1296 = vmatpush1.msra.mxu0 0.0
        %1297 = vmatprep.subr.mxu0 0.0
        %1298 = vmatpush1.msra.mxu0 0.0
        %1299 = vmatprep.subr.mxu0 0.0
        %1300 = vmatpush1.msra.mxu0 0.0
        %1301 = vmatprep.mubr.f32.mxu0 0.0
        %1302 = vmatmul.mubr.f32.gmra.mrb[0].mxu0 %v1137
        %v1303 = vpop.f32.mrb[0].mxu0
        %v1304 = vadd.f32 0.0, %v1303
        %v1305 = vpop.f32.mrb[0].mxu0
        %v1306 = vadd.f32 0.0, %v1305
        %1307 = vmatprep.mubr.f32.mxu0 0.0
        %1308 = vmatmul.mubr.f32.gmra.mrb[0].mxu0 %v1140
        %v1309 = vpop.f32.mrb[0].mxu0
        %v1310 = vadd.f32 0.0, %v1309
        %v1311 = vpop.f32.mrb[0].mxu0
        %v1312 = vadd.f32 0.0, %v1311
        %1313 = vdwg.mxu0
        %1314 = vmatprep.subr.mxu0 %v986
        %1315 = vmatpush1.msra.mxu0 %v985
        %1316 = vmatprep.subr.mxu0 %v988
        %1317 = vmatpush1.msra.mxu0 %v987
        %1318 = vmatprep.subr.mxu0 0.0
        %1319 = vmatpush1.msra.mxu0 0.0
        %1320 = vmatprep.subr.mxu0 0.0
        %1321 = vmatpush1.msra.mxu0 0.0
        %1322 = vmatprep.subr.mxu0 0.0
        %1323 = vmatpush1.msra.mxu0 0.0
        %1324 = vmatprep.subr.mxu0 0.0
        %1325 = vmatpush1.msra.mxu0 0.0
        %1326 = vmatprep.subr.mxu0 0.0
        %1327 = vmatpush1.msra.mxu0 0.0
        %1328 = vmatprep.subr.mxu0 0.0
        %1329 = vmatpush1.msra.mxu0 0.0
        %1330 = vmatprep.subr.mxu0 0.0
        %1331 = vmatpush1.msra.mxu0 0.0
        %1332 = vmatprep.subr.mxu0 0.0
        %1333 = vmatpush1.msra.mxu0 0.0
        %1334 = vmatprep.subr.mxu0 0.0
        %1335 = vmatpush1.msra.mxu0 0.0
        %1336 = vmatprep.subr.mxu0 0.0
        %1337 = vmatpush1.msra.mxu0 0.0
        %1338 = vmatprep.subr.mxu0 0.0
        %1339 = vmatpush1.msra.mxu0 0.0
        %1340 = vmatprep.subr.mxu0 0.0
        %1341 = vmatpush1.msra.mxu0 0.0
        %1342 = vmatprep.subr.mxu0 0.0
        %1343 = vmatpush1.msra.mxu0 0.0
        %1344 = vmatprep.subr.mxu0 0.0
        %1345 = vmatpush1.msra.mxu0 0.0
        %1346 = vmatprep.subr.mxu0 0.0
        %1347 = vmatpush1.msra.mxu0 0.0
        %1348 = vmatprep.subr.mxu0 0.0
        %1349 = vmatpush1.msra.mxu0 0.0
        %1350 = vmatprep.subr.mxu0 0.0
        %1351 = vmatpush1.msra.mxu0 0.0
        %1352 = vmatprep.subr.mxu0 0.0
        %1353 = vmatpush1.msra.mxu0 0.0
        %1354 = vmatprep.subr.mxu0 0.0
        %1355 = vmatpush1.msra.mxu0 0.0
        %1356 = vmatprep.subr.mxu0 0.0
        %1357 = vmatpush1.msra.mxu0 0.0
        %1358 = vmatprep.subr.mxu0 0.0
        %1359 = vmatpush1.msra.mxu0 0.0
        %1360 = vmatprep.subr.mxu0 0.0
        %1361 = vmatpush1.msra.mxu0 0.0
        %1362 = vmatprep.subr.mxu0 0.0
        %1363 = vmatpush1.msra.mxu0 0.0
        %1364 = vmatprep.subr.mxu0 0.0
        %1365 = vmatpush1.msra.mxu0 0.0
        %1366 = vmatprep.subr.mxu0 0.0
        %1367 = vmatpush1.msra.mxu0 0.0
        %1368 = vmatprep.subr.mxu0 0.0
        %1369 = vmatpush1.msra.mxu0 0.0
        %1370 = vmatprep.subr.mxu0 0.0
        %1371 = vmatpush1.msra.mxu0 0.0
        %1372 = vmatprep.subr.mxu0 0.0
        %1373 = vmatpush1.msra.mxu0 0.0
        %1374 = vmatprep.subr.mxu0 0.0
        %1375 = vmatpush1.msra.mxu0 0.0
        %1376 = vmatprep.subr.mxu0 0.0
        %1377 = vmatpush1.msra.mxu0 0.0
        %1378 = vmatprep.mubr.f32.mxu0 0.0
        %1379 = vmatmul.mubr.f32.gmra.mrb[0].mxu0 %v1022
        %v1380 = vpop.f32.mrb[0].mxu0
        %v1381 = vadd.f32 %v1304, %v1380
        %v1382 = vpop.f32.mrb[0].mxu0
        %v1383 = vadd.f32 %v1306, %v1382
        %1384 = vmatprep.mubr.f32.mxu0 0.0
        %1385 = vmatmul.mubr.f32.gmra.mrb[0].mxu0 %v1025
        %v1386 = vpop.f32.mrb[0].mxu0
        %v1387 = vadd.f32 %v1310, %v1386
        %v1388 = vpop.f32.mrb[0].mxu0
        %v1389 = vadd.f32 %v1312, %v1388
        %1390 = vdwg.mxu0
        %1392 = vset.pattern.permute.xlu0 0
        %1393 = vperm.xlu0 %1392, %v562
        %v1394 = vpop.permute.xlu0 %1393
        %1397 = vset.pattern.permute.xlu0 0
        %1398 = vperm.xlu0 %1397, %v563
        %v1399 = vpop.permute.xlu0 %1398
        %v1401 = vadd.f32 %v1381, %v1394
        %v1402 = vadd.f32 %v1383, %v1394
        %v1403 = vadd.f32 %v1387, %v1399
        %v1404 = vadd.f32 %v1389, %v1399
        %vm1405 = vcmp.gt.f32.partialorder %v1233, 0.01
        %vm1406 = vcmp.gt.f32.partialorder %v1234, 0.01
        %vm1407 = vcmp.gt.f32.partialorder %v1235, 0.01
        %vm1408 = vcmp.gt.f32.partialorder %v1236, 0.01
        %v1409 = vsub.f32 %v1233, 0.01
        %v1410 = vsub.f32 %v1234, 0.01
        %v1411 = vsub.f32 %v1235, 0.01
        %v1412 = vsub.f32 %v1236, 0.01
        %vm1413 = vcmp.lt.f32.partialorder %v1233, -0.01
        %vm1414 = vcmp.lt.f32.partialorder %v1234, -0.01
        %vm1415 = vcmp.lt.f32.partialorder %v1235, -0.01
        %vm1416 = vcmp.lt.f32.partialorder %v1236, -0.01
        %v1417 = vadd.f32 %v1233, 0.01
        %v1418 = vadd.f32 %v1234, 0.01
        %v1419 = vadd.f32 %v1235, 0.01
        %v1420 = vadd.f32 %v1236, 0.01
        %v1421 = vsel %vm1413, %v1417, 0.0
        %v1422 = vsel %vm1414, %v1418, 0.0
        %v1423 = vsel %vm1415, %v1419, 0.0
        %v1424 = vsel %vm1416, %v1420, 0.0
        %v1425 = vsel %vm1405, %v1409, %v1421
        %v1426 = vsel %vm1406, %v1410, %v1422
        %v1427 = vsel %vm1407, %v1411, %v1423
        %v1428 = vsel %vm1408, %v1412, %v1424
        %vm1429 = vcmp.gt.f32.partialorder %v1401, 0.01
        %vm1430 = vcmp.gt.f32.partialorder %v1402, 0.01
        %vm1431 = vcmp.gt.f32.partialorder %v1403, 0.01
        %vm1432 = vcmp.gt.f32.partialorder %v1404, 0.01
        %v1433 = vsub.f32 %v1401, 0.01
        %v1434 = vsub.f32 %v1402, 0.01
        %v1435 = vsub.f32 %v1403, 0.01
        %v1436 = vsub.f32 %v1404, 0.01
        %vm1437 = vcmp.lt.f32.partialorder %v1401, -0.01
        %vm1438 = vcmp.lt.f32.partialorder %v1402, -0.01
        %vm1439 = vcmp.lt.f32.partialorder %v1403, -0.01
        %vm1440 = vcmp.lt.f32.partialorder %v1404, -0.01
        %v1441 = vadd.f32 %v1401, 0.01
        %v1442 = vadd.f32 %v1402, 0.01
        %v1443 = vadd.f32 %v1403, 0.01
        %v1444 = vadd.f32 %v1404, 0.01
        %v1445 = vsel %vm1437, %v1441, 0.0
        %v1446 = vsel %vm1438, %v1442, 0.0
        %v1447 = vsel %vm1439, %v1443, 0.0
        %v1448 = vsel %vm1440, %v1444, 0.0
        %v1449 = vsel %vm1429, %v1433, %v1445
        %v1450 = vsel %vm1430, %v1434, %v1446
        %v1451 = vsel %vm1431, %v1435, %v1447
        %v1452 = vsel %vm1432, %v1436, %v1448
        %v1453 = vld [vmem:[#allocation9] sm:$0xff]
        %v1454 = vld [vmem:[#allocation9 + $0x8] sm:$0xff]
        %s1455 = scalar_lea.vmem [#allocation9], 16
        %v1456 = vld [vmem:[%s1455] sm:$0xff]
        %v1457 = vld [vmem:[%s1455 + $0x8] sm:$0xff]
        %v1458 = vld [vmem:[%s7] sm:$0xff]
        %v1459 = vld [vmem:[%s7 + $0x8] sm:$0xff]
        %s1460 = scalar_lea.vmem %s7, 16
        %v1461 = vld [vmem:[%s1460] sm:$0xff]
        %v1462 = vld [vmem:[%s1460 + $0x8] sm:$0xff]
        %v1463 = vld [vmem:[%s8] sm:$0xff]
        %v1464 = vld [vmem:[%s8 + $0x8] sm:$0xff]
        %s1465 = scalar_lea.vmem %s8, 16
        %v1466 = vld [vmem:[%s1465] sm:$0xff]
        %v1467 = vld [vmem:[%s1465 + $0x8] sm:$0xff]
        %v1468 = vld [vmem:[%s9] sm:$0xff]
        %v1469 = vld [vmem:[%s9 + $0x8] sm:$0xff]
        %s1470 = scalar_lea.vmem %s9, 16
        %v1471 = vld [vmem:[%s1470] sm:$0xff]
        %v1472 = vld [vmem:[%s1470 + $0x8] sm:$0xff]
        %1473 = vxpose.xlu0.b32.start [1/16] %v1453, 128
        %1474 = vxpose.xlu0.b32.cont [2/16] %v1454, 128
        %1475 = vxpose.xlu0.b32.cont [3/16] 0.0, 128
        %1476 = vxpose.xlu0.b32.cont [4/16] 0.0, 128
        %1477 = vxpose.xlu0.b32.cont [5/16] 0.0, 128
        %1478 = vxpose.xlu0.b32.cont [6/16] 0.0, 128
        %1479 = vxpose.xlu0.b32.cont [7/16] 0.0, 128
        %1480 = vxpose.xlu0.b32.cont [8/16] 0.0, 128
        %1481 = vxpose.xlu0.b32.cont [9/16] 0.0, 128
        %1482 = vxpose.xlu0.b32.cont [10/16] 0.0, 128
        %1483 = vxpose.xlu0.b32.cont [11/16] 0.0, 128
        %1484 = vxpose.xlu0.b32.cont [12/16] 0.0, 128
        %1485 = vxpose.xlu0.b32.cont [13/16] 0.0, 128
        %1486 = vxpose.xlu0.b32.cont [14/16] 0.0, 128
        %1487 = vxpose.xlu0.b32.cont [15/16] 0.0, 128
        %1488 = vxpose.xlu0.b32.end [16/16] 0.0, 128
        %v1489 = vpop.trf.xlu0
        %v1490 = vpop.trf.xlu0
        %v1491 = vpop.trf.xlu0
        %v1492 = vpop.trf.xlu0
        %v1493 = vpop.trf.xlu0
        %v1494 = vpop.trf.xlu0
        %v1495 = vpop.trf.xlu0
        %v1496 = vpop.trf.xlu0
        %v1497 = vpop.trf.xlu0
        %v1498 = vpop.trf.xlu0
        %v1499 = vpop.trf.xlu0
        %v1500 = vpop.trf.xlu0
        %v1501 = vpop.trf.xlu0
        %v1502 = vpop.trf.xlu0
        %v1503 = vpop.trf.xlu0
        %v1504 = vpop.trf.xlu0
        %v1506 = vsel %vm596, %v1489, 0
        %v1509 = vsel %vm596, %v1490, 0
        %1511 = vmatprep.subr.mxu0 %v536
        %1512 = vmatpush1.msra.mxu0 %v535
        %1513 = vmatprep.subr.mxu0 %v538
        %1514 = vmatpush1.msra.mxu0 %v537
        %1515 = vmatprep.subr.mxu0 0.0
        %1516 = vmatpush1.msra.mxu0 0.0
        %1517 = vmatprep.subr.mxu0 0.0
        %1518 = vmatpush1.msra.mxu0 0.0
        %1519 = vmatprep.subr.mxu0 0.0
        %1520 = vmatpush1.msra.mxu0 0.0
        %1521 = vmatprep.subr.mxu0 0.0
        %1522 = vmatpush1.msra.mxu0 0.0
        %1523 = vmatprep.subr.mxu0 0.0
        %1524 = vmatpush1.msra.mxu0 0.0
        %1525 = vmatprep.subr.mxu0 0.0
        %1526 = vmatpush1.msra.mxu0 0.0
        %1527 = vmatprep.subr.mxu0 0.0
        %1528 = vmatpush1.msra.mxu0 0.0
        %1529 = vmatprep.subr.mxu0 0.0
        %1530 = vmatpush1.msra.mxu0 0.0
        %1531 = vmatprep.subr.mxu0 0.0
        %1532 = vmatpush1.msra.mxu0 0.0
        %1533 = vmatprep.subr.mxu0 0.0
        %1534 = vmatpush1.msra.mxu0 0.0
        %1535 = vmatprep.subr.mxu0 0.0
        %1536 = vmatpush1.msra.mxu0 0.0
        %1537 = vmatprep.subr.mxu0 0.0
        %1538 = vmatpush1.msra.mxu0 0.0
        %1539 = vmatprep.subr.mxu0 0.0
        %1540 = vmatpush1.msra.mxu0 0.0
        %1541 = vmatprep.subr.mxu0 0.0
        %1542 = vmatpush1.msra.mxu0 0.0
        %1543 = vmatprep.subr.mxu0 0.0
        %1544 = vmatpush1.msra.mxu0 0.0
        %1545 = vmatprep.subr.mxu0 0.0
        %1546 = vmatpush1.msra.mxu0 0.0
        %1547 = vmatprep.subr.mxu0 0.0
        %1548 = vmatpush1.msra.mxu0 0.0
        %1549 = vmatprep.subr.mxu0 0.0
        %1550 = vmatpush1.msra.mxu0 0.0
        %1551 = vmatprep.subr.mxu0 0.0
        %1552 = vmatpush1.msra.mxu0 0.0
        %1553 = vmatprep.subr.mxu0 0.0
        %1554 = vmatpush1.msra.mxu0 0.0
        %1555 = vmatprep.subr.mxu0 0.0
        %1556 = vmatpush1.msra.mxu0 0.0
        %1557 = vmatprep.subr.mxu0 0.0
        %1558 = vmatpush1.msra.mxu0 0.0
        %1559 = vmatprep.subr.mxu0 0.0
        %1560 = vmatpush1.msra.mxu0 0.0
        %1561 = vmatprep.subr.mxu0 0.0
        %1562 = vmatpush1.msra.mxu0 0.0
        %1563 = vmatprep.subr.mxu0 0.0
        %1564 = vmatpush1.msra.mxu0 0.0
        %1565 = vmatprep.subr.mxu0 0.0
        %1566 = vmatpush1.msra.mxu0 0.0
        %1567 = vmatprep.subr.mxu0 0.0
        %1568 = vmatpush1.msra.mxu0 0.0
        %1569 = vmatprep.subr.mxu0 0.0
        %1570 = vmatpush1.msra.mxu0 0.0
        %1571 = vmatprep.subr.mxu0 0.0
        %1572 = vmatpush1.msra.mxu0 0.0
        %1573 = vmatprep.subr.mxu0 0.0
        %1574 = vmatpush1.msra.mxu0 0.0
        %1575 = vmatprep.mubr.f32.mxu0 0.0
        %1576 = vmatmul.mubr.f32.gmra.mrb[0].mxu0 %v1506
        %v1577 = vpop.f32.mrb[0].mxu0
        %v1578 = vadd.f32 0.0, %v1577
        %v1579 = vpop.f32.mrb[0].mxu0
        %v1580 = vadd.f32 0.0, %v1579
        %1581 = vmatprep.mubr.f32.mxu0 0.0
        %1582 = vmatmul.mubr.f32.gmra.mrb[0].mxu0 %v1509
        %v1583 = vpop.f32.mrb[0].mxu0
        %v1584 = vadd.f32 0.0, %v1583
        %v1585 = vpop.f32.mrb[0].mxu0
        %v1586 = vadd.f32 0.0, %v1585
        %1587 = vdwg.mxu0
        %1588 = vxpose.xlu0.b32.start [1/16] %v1456, 128
        %1589 = vxpose.xlu0.b32.cont [2/16] %v1457, 128
        %1590 = vxpose.xlu0.b32.cont [3/16] 0.0, 128
        %1591 = vxpose.xlu0.b32.cont [4/16] 0.0, 128
        %1592 = vxpose.xlu0.b32.cont [5/16] 0.0, 128
        %1593 = vxpose.xlu0.b32.cont [6/16] 0.0, 128
        %1594 = vxpose.xlu0.b32.cont [7/16] 0.0, 128
        %1595 = vxpose.xlu0.b32.cont [8/16] 0.0, 128
        %1596 = vxpose.xlu0.b32.cont [9/16] 0.0, 128
        %1597 = vxpose.xlu0.b32.cont [10/16] 0.0, 128
        %1598 = vxpose.xlu0.b32.cont [11/16] 0.0, 128
        %1599 = vxpose.xlu0.b32.cont [12/16] 0.0, 128
        %1600 = vxpose.xlu0.b32.cont [13/16] 0.0, 128
        %1601 = vxpose.xlu0.b32.cont [14/16] 0.0, 128
        %1602 = vxpose.xlu0.b32.cont [15/16] 0.0, 128
        %1603 = vxpose.xlu0.b32.end [16/16] 0.0, 128
        %v1604 = vpop.trf.xlu0
        %v1605 = vpop.trf.xlu0
        %v1606 = vpop.trf.xlu0
        %v1607 = vpop.trf.xlu0
        %v1608 = vpop.trf.xlu0
        %v1609 = vpop.trf.xlu0
        %v1610 = vpop.trf.xlu0
        %v1611 = vpop.trf.xlu0
        %v1612 = vpop.trf.xlu0
        %v1613 = vpop.trf.xlu0
        %v1614 = vpop.trf.xlu0
        %v1615 = vpop.trf.xlu0
        %v1616 = vpop.trf.xlu0
        %v1617 = vpop.trf.xlu0
        %v1618 = vpop.trf.xlu0
        %v1619 = vpop.trf.xlu0
        %v1621 = vsel %vm596, %v1604, 0
        %v1624 = vsel %vm596, %v1605, 0
        %1626 = vmatprep.subr.mxu0 %v541
        %1627 = vmatpush1.msra.mxu0 %v540
        %1628 = vmatprep.subr.mxu0 %v543
        %1629 = vmatpush1.msra.mxu0 %v542
        %1630 = vmatprep.subr.mxu0 0.0
        %1631 = vmatpush1.msra.mxu0 0.0
        %1632 = vmatprep.subr.mxu0 0.0
        %1633 = vmatpush1.msra.mxu0 0.0
        %1634 = vmatprep.subr.mxu0 0.0
        %1635 = vmatpush1.msra.mxu0 0.0
        %1636 = vmatprep.subr.mxu0 0.0
        %1637 = vmatpush1.msra.mxu0 0.0
        %1638 = vmatprep.subr.mxu0 0.0
        %1639 = vmatpush1.msra.mxu0 0.0
        %1640 = vmatprep.subr.mxu0 0.0
        %1641 = vmatpush1.msra.mxu0 0.0
        %1642 = vmatprep.subr.mxu0 0.0
        %1643 = vmatpush1.msra.mxu0 0.0
        %1644 = vmatprep.subr.mxu0 0.0
        %1645 = vmatpush1.msra.mxu0 0.0
        %1646 = vmatprep.subr.mxu0 0.0
        %1647 = vmatpush1.msra.mxu0 0.0
        %1648 = vmatprep.subr.mxu0 0.0
        %1649 = vmatpush1.msra.mxu0 0.0
        %1650 = vmatprep.subr.mxu0 0.0
        %1651 = vmatpush1.msra.mxu0 0.0
        %1652 = vmatprep.subr.mxu0 0.0
        %1653 = vmatpush1.msra.mxu0 0.0
        %1654 = vmatprep.subr.mxu0 0.0
        %1655 = vmatpush1.msra.mxu0 0.0
        %1656 = vmatprep.subr.mxu0 0.0
        %1657 = vmatpush1.msra.mxu0 0.0
        %1658 = vmatprep.subr.mxu0 0.0
        %1659 = vmatpush1.msra.mxu0 0.0
        %1660 = vmatprep.subr.mxu0 0.0
        %1661 = vmatpush1.msra.mxu0 0.0
        %1662 = vmatprep.subr.mxu0 0.0
        %1663 = vmatpush1.msra.mxu0 0.0
        %1664 = vmatprep.subr.mxu0 0.0
        %1665 = vmatpush1.msra.mxu0 0.0
        %1666 = vmatprep.subr.mxu0 0.0
        %1667 = vmatpush1.msra.mxu0 0.0
        %1668 = vmatprep.subr.mxu0 0.0
        %1669 = vmatpush1.msra.mxu0 0.0
        %1670 = vmatprep.subr.mxu0 0.0
        %1671 = vmatpush1.msra.mxu0 0.0
        %1672 = vmatprep.subr.mxu0 0.0
        %1673 = vmatpush1.msra.mxu0 0.0
        %1674 = vmatprep.subr.mxu0 0.0
        %1675 = vmatpush1.msra.mxu0 0.0
        %1676 = vmatprep.subr.mxu0 0.0
        %1677 = vmatpush1.msra.mxu0 0.0
        %1678 = vmatprep.subr.mxu0 0.0
        %1679 = vmatpush1.msra.mxu0 0.0
        %1680 = vmatprep.subr.mxu0 0.0
        %1681 = vmatpush1.msra.mxu0 0.0
        %1682 = vmatprep.subr.mxu0 0.0
        %1683 = vmatpush1.msra.mxu0 0.0
        %1684 = vmatprep.subr.mxu0 0.0
        %1685 = vmatpush1.msra.mxu0 0.0
        %1686 = vmatprep.subr.mxu0 0.0
        %1687 = vmatpush1.msra.mxu0 0.0
        %1688 = vmatprep.subr.mxu0 0.0
        %1689 = vmatpush1.msra.mxu0 0.0
        %1690 = vmatprep.mubr.f32.mxu0 0.0
        %1691 = vmatmul.mubr.f32.gmra.mrb[0].mxu0 %v1621
        %v1692 = vpop.f32.mrb[0].mxu0
        %v1693 = vadd.f32 0.0, %v1692
        %v1694 = vpop.f32.mrb[0].mxu0
        %v1695 = vadd.f32 0.0, %v1694
        %1696 = vmatprep.mubr.f32.mxu0 0.0
        %1697 = vmatmul.mubr.f32.gmra.mrb[0].mxu0 %v1624
        %v1698 = vpop.f32.mrb[0].mxu0
        %v1699 = vadd.f32 0.0, %v1698
        %v1700 = vpop.f32.mrb[0].mxu0
        %v1701 = vadd.f32 0.0, %v1700
        %1702 = vdwg.mxu0
        %v1703 = vsub.f32 %v1578, %v1693
        %v1704 = vsub.f32 %v1580, %v1695
        %v1705 = vsub.f32 %v1584, %v1699
        %v1706 = vsub.f32 %v1586, %v1701
        %1708 = vset.pattern.permute.xlu0 0
        %1709 = vperm.xlu0 %1708, %v1458
        %v1710 = vpop.permute.xlu0 %1709
        %1713 = vset.pattern.permute.xlu0 0
        %1714 = vperm.xlu0 %1713, %v1459
        %v1715 = vpop.permute.xlu0 %1714
        %v1717 = vadd.f32 %v1703, %v1710
        %v1718 = vadd.f32 %v1704, %v1710
        %v1719 = vadd.f32 %v1705, %v1715
        %v1720 = vadd.f32 %v1706, %v1715
        %v1721 = vmax.f32 %v1717, 0.0
        %v1722 = vmax.f32 %v1718, 0.0
        %v1723 = vmax.f32 %v1719, 0.0
        %v1724 = vmax.f32 %v1720, 0.0
        %1725 = vmatprep.subr.mxu0 %v536
        %1726 = vmatpush1.msra.mxu0 %v535
        %1727 = vmatprep.subr.mxu0 %v538
        %1728 = vmatpush1.msra.mxu0 %v537
        %1729 = vmatprep.subr.mxu0 0.0
        %1730 = vmatpush1.msra.mxu0 0.0
        %1731 = vmatprep.subr.mxu0 0.0
        %1732 = vmatpush1.msra.mxu0 0.0
        %1733 = vmatprep.subr.mxu0 0.0
        %1734 = vmatpush1.msra.mxu0 0.0
        %1735 = vmatprep.subr.mxu0 0.0
        %1736 = vmatpush1.msra.mxu0 0.0
        %1737 = vmatprep.subr.mxu0 0.0
        %1738 = vmatpush1.msra.mxu0 0.0
        %1739 = vmatprep.subr.mxu0 0.0
        %1740 = vmatpush1.msra.mxu0 0.0
        %1741 = vmatprep.subr.mxu0 0.0
        %1742 = vmatpush1.msra.mxu0 0.0
        %1743 = vmatprep.subr.mxu0 0.0
        %1744 = vmatpush1.msra.mxu0 0.0
        %1745 = vmatprep.subr.mxu0 0.0
        %1746 = vmatpush1.msra.mxu0 0.0
        %1747 = vmatprep.subr.mxu0 0.0
        %1748 = vmatpush1.msra.mxu0 0.0
        %1749 = vmatprep.subr.mxu0 0.0
        %1750 = vmatpush1.msra.mxu0 0.0
        %1751 = vmatprep.subr.mxu0 0.0
        %1752 = vmatpush1.msra.mxu0 0.0
        %1753 = vmatprep.subr.mxu0 0.0
        %1754 = vmatpush1.msra.mxu0 0.0
        %1755 = vmatprep.subr.mxu0 0.0
        %1756 = vmatpush1.msra.mxu0 0.0
        %1757 = vmatprep.subr.mxu0 0.0
        %1758 = vmatpush1.msra.mxu0 0.0
        %1759 = vmatprep.subr.mxu0 0.0
        %1760 = vmatpush1.msra.mxu0 0.0
        %1761 = vmatprep.subr.mxu0 0.0
        %1762 = vmatpush1.msra.mxu0 0.0
        %1763 = vmatprep.subr.mxu0 0.0
        %1764 = vmatpush1.msra.mxu0 0.0
        %1765 = vmatprep.subr.mxu0 0.0
        %1766 = vmatpush1.msra.mxu0 0.0
        %1767 = vmatprep.subr.mxu0 0.0
        %1768 = vmatpush1.msra.mxu0 0.0
        %1769 = vmatprep.subr.mxu0 0.0
        %1770 = vmatpush1.msra.mxu0 0.0
        %1771 = vmatprep.subr.mxu0 0.0
        %1772 = vmatpush1.msra.mxu0 0.0
        %1773 = vmatprep.subr.mxu0 0.0
        %1774 = vmatpush1.msra.mxu0 0.0
        %1775 = vmatprep.subr.mxu0 0.0
        %1776 = vmatpush1.msra.mxu0 0.0
        %1777 = vmatprep.subr.mxu0 0.0
        %1778 = vmatpush1.msra.mxu0 0.0
        %1779 = vmatprep.subr.mxu0 0.0
        %1780 = vmatpush1.msra.mxu0 0.0
        %1781 = vmatprep.subr.mxu0 0.0
        %1782 = vmatpush1.msra.mxu0 0.0
        %1783 = vmatprep.subr.mxu0 0.0
        %1784 = vmatpush1.msra.mxu0 0.0
        %1785 = vmatprep.subr.mxu0 0.0
        %1786 = vmatpush1.msra.mxu0 0.0
        %1787 = vmatprep.subr.mxu0 0.0
        %1788 = vmatpush1.msra.mxu0 0.0
        %1789 = vmatprep.mubr.f32.mxu0 0.0
        %1790 = vmatmul.mubr.f32.gmra.mrb[0].mxu0 %v1621
        %v1791 = vpop.f32.mrb[0].mxu0
        %v1792 = vadd.f32 0.0, %v1791
        %v1793 = vpop.f32.mrb[0].mxu0
        %v1794 = vadd.f32 0.0, %v1793
        %1795 = vmatprep.mubr.f32.mxu0 0.0
        %1796 = vmatmul.mubr.f32.gmra.mrb[0].mxu0 %v1624
        %v1797 = vpop.f32.mrb[0].mxu0
        %v1798 = vadd.f32 0.0, %v1797
        %v1799 = vpop.f32.mrb[0].mxu0
        %v1800 = vadd.f32 0.0, %v1799
        %1801 = vdwg.mxu0
        %1802 = vmatprep.subr.mxu0 %v541
        %1803 = vmatpush1.msra.mxu0 %v540
        %1804 = vmatprep.subr.mxu0 %v543
        %1805 = vmatpush1.msra.mxu0 %v542
        %1806 = vmatprep.subr.mxu0 0.0
        %1807 = vmatpush1.msra.mxu0 0.0
        %1808 = vmatprep.subr.mxu0 0.0
        %1809 = vmatpush1.msra.mxu0 0.0
        %1810 = vmatprep.subr.mxu0 0.0
        %1811 = vmatpush1.msra.mxu0 0.0
        %1812 = vmatprep.subr.mxu0 0.0
        %1813 = vmatpush1.msra.mxu0 0.0
        %1814 = vmatprep.subr.mxu0 0.0
        %1815 = vmatpush1.msra.mxu0 0.0
        %1816 = vmatprep.subr.mxu0 0.0
        %1817 = vmatpush1.msra.mxu0 0.0
        %1818 = vmatprep.subr.mxu0 0.0
        %1819 = vmatpush1.msra.mxu0 0.0
        %1820 = vmatprep.subr.mxu0 0.0
        %1821 = vmatpush1.msra.mxu0 0.0
        %1822 = vmatprep.subr.mxu0 0.0
        %1823 = vmatpush1.msra.mxu0 0.0
        %1824 = vmatprep.subr.mxu0 0.0
        %1825 = vmatpush1.msra.mxu0 0.0
        %1826 = vmatprep.subr.mxu0 0.0
        %1827 = vmatpush1.msra.mxu0 0.0
        %1828 = vmatprep.subr.mxu0 0.0
        %1829 = vmatpush1.msra.mxu0 0.0
        %1830 = vmatprep.subr.mxu0 0.0
        %1831 = vmatpush1.msra.mxu0 0.0
        %1832 = vmatprep.subr.mxu0 0.0
        %1833 = vmatpush1.msra.mxu0 0.0
        %1834 = vmatprep.subr.mxu0 0.0
        %1835 = vmatpush1.msra.mxu0 0.0
        %1836 = vmatprep.subr.mxu0 0.0
        %1837 = vmatpush1.msra.mxu0 0.0
        %1838 = vmatprep.subr.mxu0 0.0
        %1839 = vmatpush1.msra.mxu0 0.0
        %1840 = vmatprep.subr.mxu0 0.0
        %1841 = vmatpush1.msra.mxu0 0.0
        %1842 = vmatprep.subr.mxu0 0.0
        %1843 = vmatpush1.msra.mxu0 0.0
        %1844 = vmatprep.subr.mxu0 0.0
        %1845 = vmatpush1.msra.mxu0 0.0
        %1846 = vmatprep.subr.mxu0 0.0
        %1847 = vmatpush1.msra.mxu0 0.0
        %1848 = vmatprep.subr.mxu0 0.0
        %1849 = vmatpush1.msra.mxu0 0.0
        %1850 = vmatprep.subr.mxu0 0.0
        %1851 = vmatpush1.msra.mxu0 0.0
        %1852 = vmatprep.subr.mxu0 0.0
        %1853 = vmatpush1.msra.mxu0 0.0
        %1854 = vmatprep.subr.mxu0 0.0
        %1855 = vmatpush1.msra.mxu0 0.0
        %1856 = vmatprep.subr.mxu0 0.0
        %1857 = vmatpush1.msra.mxu0 0.0
        %1858 = vmatprep.subr.mxu0 0.0
        %1859 = vmatpush1.msra.mxu0 0.0
        %1860 = vmatprep.subr.mxu0 0.0
        %1861 = vmatpush1.msra.mxu0 0.0
        %1862 = vmatprep.subr.mxu0 0.0
        %1863 = vmatpush1.msra.mxu0 0.0
        %1864 = vmatprep.subr.mxu0 0.0
        %1865 = vmatpush1.msra.mxu0 0.0
        %1866 = vmatprep.mubr.f32.mxu0 0.0
        %1867 = vmatmul.mubr.f32.gmra.mrb[0].mxu0 %v1506
        %v1868 = vpop.f32.mrb[0].mxu0
        %v1869 = vadd.f32 %v1792, %v1868
        %v1870 = vpop.f32.mrb[0].mxu0
        %v1871 = vadd.f32 %v1794, %v1870
        %1872 = vmatprep.mubr.f32.mxu0 0.0
        %1873 = vmatmul.mubr.f32.gmra.mrb[0].mxu0 %v1509
        %v1874 = vpop.f32.mrb[0].mxu0
        %v1875 = vadd.f32 %v1798, %v1874
        %v1876 = vpop.f32.mrb[0].mxu0
        %v1877 = vadd.f32 %v1800, %v1876
        %1878 = vdwg.mxu0
        %1880 = vset.pattern.permute.xlu0 0
        %1881 = vperm.xlu0 %1880, %v1461
        %v1882 = vpop.permute.xlu0 %1881
        %1885 = vset.pattern.permute.xlu0 0
        %1886 = vperm.xlu0 %1885, %v1462
        %v1887 = vpop.permute.xlu0 %1886
        %v1889 = vadd.f32 %v1869, %v1882
        %v1890 = vadd.f32 %v1871, %v1882
        %v1891 = vadd.f32 %v1875, %v1887
        %v1892 = vadd.f32 %v1877, %v1887
        %v1893 = vmax.f32 %v1889, 0.0
        %v1894 = vmax.f32 %v1890, 0.0
        %v1895 = vmax.f32 %v1891, 0.0
        %v1896 = vmax.f32 %v1892, 0.0
        %1897 = vxpose.xlu0.b32.start [1/16] %v1463, 128
        %1898 = vxpose.xlu0.b32.cont [2/16] %v1464, 128
        %1899 = vxpose.xlu0.b32.cont [3/16] 0.0, 128
        %1900 = vxpose.xlu0.b32.cont [4/16] 0.0, 128
        %1901 = vxpose.xlu0.b32.cont [5/16] 0.0, 128
        %1902 = vxpose.xlu0.b32.cont [6/16] 0.0, 128
        %1903 = vxpose.xlu0.b32.cont [7/16] 0.0, 128
        %1904 = vxpose.xlu0.b32.cont [8/16] 0.0, 128
        %1905 = vxpose.xlu0.b32.cont [9/16] 0.0, 128
        %1906 = vxpose.xlu0.b32.cont [10/16] 0.0, 128
        %1907 = vxpose.xlu0.b32.cont [11/16] 0.0, 128
        %1908 = vxpose.xlu0.b32.cont [12/16] 0.0, 128
        %1909 = vxpose.xlu0.b32.cont [13/16] 0.0, 128
        %1910 = vxpose.xlu0.b32.cont [14/16] 0.0, 128
        %1911 = vxpose.xlu0.b32.cont [15/16] 0.0, 128
        %1912 = vxpose.xlu0.b32.end [16/16] 0.0, 128
        %v1913 = vpop.trf.xlu0
        %v1914 = vpop.trf.xlu0
        %v1915 = vpop.trf.xlu0
        %v1916 = vpop.trf.xlu0
        %v1917 = vpop.trf.xlu0
        %v1918 = vpop.trf.xlu0
        %v1919 = vpop.trf.xlu0
        %v1920 = vpop.trf.xlu0
        %v1921 = vpop.trf.xlu0
        %v1922 = vpop.trf.xlu0
        %v1923 = vpop.trf.xlu0
        %v1924 = vpop.trf.xlu0
        %v1925 = vpop.trf.xlu0
        %v1926 = vpop.trf.xlu0
        %v1927 = vpop.trf.xlu0
        %v1928 = vpop.trf.xlu0
        %v1930 = vsel %vm596, %v1913, 0
        %v1933 = vsel %vm596, %v1914, 0
        %1935 = vmatprep.subr.mxu0 %v1722
        %1936 = vmatpush1.msra.mxu0 %v1721
        %1937 = vmatprep.subr.mxu0 %v1724
        %1938 = vmatpush1.msra.mxu0 %v1723
        %1939 = vmatprep.subr.mxu0 0.0
        %1940 = vmatpush1.msra.mxu0 0.0
        %1941 = vmatprep.subr.mxu0 0.0
        %1942 = vmatpush1.msra.mxu0 0.0
        %1943 = vmatprep.subr.mxu0 0.0
        %1944 = vmatpush1.msra.mxu0 0.0
        %1945 = vmatprep.subr.mxu0 0.0
        %1946 = vmatpush1.msra.mxu0 0.0
        %1947 = vmatprep.subr.mxu0 0.0
        %1948 = vmatpush1.msra.mxu0 0.0
        %1949 = vmatprep.subr.mxu0 0.0
        %1950 = vmatpush1.msra.mxu0 0.0
        %1951 = vmatprep.subr.mxu0 0.0
        %1952 = vmatpush1.msra.mxu0 0.0
        %1953 = vmatprep.subr.mxu0 0.0
        %1954 = vmatpush1.msra.mxu0 0.0
        %1955 = vmatprep.subr.mxu0 0.0
        %1956 = vmatpush1.msra.mxu0 0.0
        %1957 = vmatprep.subr.mxu0 0.0
        %1958 = vmatpush1.msra.mxu0 0.0
        %1959 = vmatprep.subr.mxu0 0.0
        %1960 = vmatpush1.msra.mxu0 0.0
        %1961 = vmatprep.subr.mxu0 0.0
        %1962 = vmatpush1.msra.mxu0 0.0
        %1963 = vmatprep.subr.mxu0 0.0
        %1964 = vmatpush1.msra.mxu0 0.0
        %1965 = vmatprep.subr.mxu0 0.0
        %1966 = vmatpush1.msra.mxu0 0.0
        %1967 = vmatprep.subr.mxu0 0.0
        %1968 = vmatpush1.msra.mxu0 0.0
        %1969 = vmatprep.subr.mxu0 0.0
        %1970 = vmatpush1.msra.mxu0 0.0
        %1971 = vmatprep.subr.mxu0 0.0
        %1972 = vmatpush1.msra.mxu0 0.0
        %1973 = vmatprep.subr.mxu0 0.0
        %1974 = vmatpush1.msra.mxu0 0.0
        %1975 = vmatprep.subr.mxu0 0.0
        %1976 = vmatpush1.msra.mxu0 0.0
        %1977 = vmatprep.subr.mxu0 0.0
        %1978 = vmatpush1.msra.mxu0 0.0
        %1979 = vmatprep.subr.mxu0 0.0
        %1980 = vmatpush1.msra.mxu0 0.0
        %1981 = vmatprep.subr.mxu0 0.0
        %1982 = vmatpush1.msra.mxu0 0.0
        %1983 = vmatprep.subr.mxu0 0.0
        %1984 = vmatpush1.msra.mxu0 0.0
        %1985 = vmatprep.subr.mxu0 0.0
        %1986 = vmatpush1.msra.mxu0 0.0
        %1987 = vmatprep.subr.mxu0 0.0
        %1988 = vmatpush1.msra.mxu0 0.0
        %1989 = vmatprep.subr.mxu0 0.0
        %1990 = vmatpush1.msra.mxu0 0.0
        %1991 = vmatprep.subr.mxu0 0.0
        %1992 = vmatpush1.msra.mxu0 0.0
        %1993 = vmatprep.subr.mxu0 0.0
        %1994 = vmatpush1.msra.mxu0 0.0
        %1995 = vmatprep.subr.mxu0 0.0
        %1996 = vmatpush1.msra.mxu0 0.0
        %1997 = vmatprep.subr.mxu0 0.0
        %1998 = vmatpush1.msra.mxu0 0.0
        %1999 = vmatprep.mubr.f32.mxu0 0.0
        %2000 = vmatmul.mubr.f32.gmra.mrb[0].mxu0 %v1930
        %v2001 = vpop.f32.mrb[0].mxu0
        %v2002 = vadd.f32 0.0, %v2001
        %v2003 = vpop.f32.mrb[0].mxu0
        %v2004 = vadd.f32 0.0, %v2003
        %2005 = vmatprep.mubr.f32.mxu0 0.0
        %2006 = vmatmul.mubr.f32.gmra.mrb[0].mxu0 %v1933
        %v2007 = vpop.f32.mrb[0].mxu0
        %v2008 = vadd.f32 0.0, %v2007
        %v2009 = vpop.f32.mrb[0].mxu0
        %v2010 = vadd.f32 0.0, %v2009
        %2011 = vdwg.mxu0
        %2012 = vxpose.xlu0.b32.start [1/16] %v1466, 128
        %2013 = vxpose.xlu0.b32.cont [2/16] %v1467, 128
        %2014 = vxpose.xlu0.b32.cont [3/16] 0.0, 128
        %2015 = vxpose.xlu0.b32.cont [4/16] 0.0, 128
        %2016 = vxpose.xlu0.b32.cont [5/16] 0.0, 128
        %2017 = vxpose.xlu0.b32.cont [6/16] 0.0, 128
        %2018 = vxpose.xlu0.b32.cont [7/16] 0.0, 128
        %2019 = vxpose.xlu0.b32.cont [8/16] 0.0, 128
        %2020 = vxpose.xlu0.b32.cont [9/16] 0.0, 128
        %2021 = vxpose.xlu0.b32.cont [10/16] 0.0, 128
        %2022 = vxpose.xlu0.b32.cont [11/16] 0.0, 128
        %2023 = vxpose.xlu0.b32.cont [12/16] 0.0, 128
        %2024 = vxpose.xlu0.b32.cont [13/16] 0.0, 128
        %2025 = vxpose.xlu0.b32.cont [14/16] 0.0, 128
        %2026 = vxpose.xlu0.b32.cont [15/16] 0.0, 128
        %2027 = vxpose.xlu0.b32.end [16/16] 0.0, 128
        %v2028 = vpop.trf.xlu0
        %v2029 = vpop.trf.xlu0
        %v2030 = vpop.trf.xlu0
        %v2031 = vpop.trf.xlu0
        %v2032 = vpop.trf.xlu0
        %v2033 = vpop.trf.xlu0
        %v2034 = vpop.trf.xlu0
        %v2035 = vpop.trf.xlu0
        %v2036 = vpop.trf.xlu0
        %v2037 = vpop.trf.xlu0
        %v2038 = vpop.trf.xlu0
        %v2039 = vpop.trf.xlu0
        %v2040 = vpop.trf.xlu0
        %v2041 = vpop.trf.xlu0
        %v2042 = vpop.trf.xlu0
        %v2043 = vpop.trf.xlu0
        %v2045 = vsel %vm596, %v2028, 0
        %v2048 = vsel %vm596, %v2029, 0
        %2050 = vmatprep.subr.mxu0 %v1894
        %2051 = vmatpush1.msra.mxu0 %v1893
        %2052 = vmatprep.subr.mxu0 %v1896
        %2053 = vmatpush1.msra.mxu0 %v1895
        %2054 = vmatprep.subr.mxu0 0.0
        %2055 = vmatpush1.msra.mxu0 0.0
        %2056 = vmatprep.subr.mxu0 0.0
        %2057 = vmatpush1.msra.mxu0 0.0
        %2058 = vmatprep.subr.mxu0 0.0
        %2059 = vmatpush1.msra.mxu0 0.0
        %2060 = vmatprep.subr.mxu0 0.0
        %2061 = vmatpush1.msra.mxu0 0.0
        %2062 = vmatprep.subr.mxu0 0.0
        %2063 = vmatpush1.msra.mxu0 0.0
        %2064 = vmatprep.subr.mxu0 0.0
        %2065 = vmatpush1.msra.mxu0 0.0
        %2066 = vmatprep.subr.mxu0 0.0
        %2067 = vmatpush1.msra.mxu0 0.0
        %2068 = vmatprep.subr.mxu0 0.0
        %2069 = vmatpush1.msra.mxu0 0.0
        %2070 = vmatprep.subr.mxu0 0.0
        %2071 = vmatpush1.msra.mxu0 0.0
        %2072 = vmatprep.subr.mxu0 0.0
        %2073 = vmatpush1.msra.mxu0 0.0
        %2074 = vmatprep.subr.mxu0 0.0
        %2075 = vmatpush1.msra.mxu0 0.0
        %2076 = vmatprep.subr.mxu0 0.0
        %2077 = vmatpush1.msra.mxu0 0.0
        %2078 = vmatprep.subr.mxu0 0.0
        %2079 = vmatpush1.msra.mxu0 0.0
        %2080 = vmatprep.subr.mxu0 0.0
        %2081 = vmatpush1.msra.mxu0 0.0
        %2082 = vmatprep.subr.mxu0 0.0
        %2083 = vmatpush1.msra.mxu0 0.0
        %2084 = vmatprep.subr.mxu0 0.0
        %2085 = vmatpush1.msra.mxu0 0.0
        %2086 = vmatprep.subr.mxu0 0.0
        %2087 = vmatpush1.msra.mxu0 0.0
        %2088 = vmatprep.subr.mxu0 0.0
        %2089 = vmatpush1.msra.mxu0 0.0
        %2090 = vmatprep.subr.mxu0 0.0
        %2091 = vmatpush1.msra.mxu0 0.0
        %2092 = vmatprep.subr.mxu0 0.0
        %2093 = vmatpush1.msra.mxu0 0.0
        %2094 = vmatprep.subr.mxu0 0.0
        %2095 = vmatpush1.msra.mxu0 0.0
        %2096 = vmatprep.subr.mxu0 0.0
        %2097 = vmatpush1.msra.mxu0 0.0
        %2098 = vmatprep.subr.mxu0 0.0
        %2099 = vmatpush1.msra.mxu0 0.0
        %2100 = vmatprep.subr.mxu0 0.0
        %2101 = vmatpush1.msra.mxu0 0.0
        %2102 = vmatprep.subr.mxu0 0.0
        %2103 = vmatpush1.msra.mxu0 0.0
        %2104 = vmatprep.subr.mxu0 0.0
        %2105 = vmatpush1.msra.mxu0 0.0
        %2106 = vmatprep.subr.mxu0 0.0
        %2107 = vmatpush1.msra.mxu0 0.0
        %2108 = vmatprep.subr.mxu0 0.0
        %2109 = vmatpush1.msra.mxu0 0.0
        %2110 = vmatprep.subr.mxu0 0.0
        %2111 = vmatpush1.msra.mxu0 0.0
        %2112 = vmatprep.subr.mxu0 0.0
        %2113 = vmatpush1.msra.mxu0 0.0
        %2114 = vmatprep.mubr.f32.mxu0 0.0
        %2115 = vmatmul.mubr.f32.gmra.mrb[0].mxu0 %v2045
        %v2116 = vpop.f32.mrb[0].mxu0
        %v2117 = vadd.f32 0.0, %v2116
        %v2118 = vpop.f32.mrb[0].mxu0
        %v2119 = vadd.f32 0.0, %v2118
        %2120 = vmatprep.mubr.f32.mxu0 0.0
        %2121 = vmatmul.mubr.f32.gmra.mrb[0].mxu0 %v2048
        %v2122 = vpop.f32.mrb[0].mxu0
        %v2123 = vadd.f32 0.0, %v2122
        %v2124 = vpop.f32.mrb[0].mxu0
        %v2125 = vadd.f32 0.0, %v2124
        %2126 = vdwg.mxu0
        %v2127 = vsub.f32 %v2002, %v2117
        %v2128 = vsub.f32 %v2004, %v2119
        %v2129 = vsub.f32 %v2008, %v2123
        %v2130 = vsub.f32 %v2010, %v2125
        %2132 = vset.pattern.permute.xlu0 0
        %2133 = vperm.xlu0 %2132, %v1468
        %v2134 = vpop.permute.xlu0 %2133
        %2137 = vset.pattern.permute.xlu0 0
        %2138 = vperm.xlu0 %2137, %v1469
        %v2139 = vpop.permute.xlu0 %2138
        %v2141 = vadd.f32 %v2127, %v2134
        %v2142 = vadd.f32 %v2128, %v2134
        %v2143 = vadd.f32 %v2129, %v2139
        %v2144 = vadd.f32 %v2130, %v2139
        %2145 = vmatprep.subr.mxu0 %v1722
        %2146 = vmatpush1.msra.mxu0 %v1721
        %2147 = vmatprep.subr.mxu0 %v1724
        %2148 = vmatpush1.msra.mxu0 %v1723
        %2149 = vmatprep.subr.mxu0 0.0
        %2150 = vmatpush1.msra.mxu0 0.0
        %2151 = vmatprep.subr.mxu0 0.0
        %2152 = vmatpush1.msra.mxu0 0.0
        %2153 = vmatprep.subr.mxu0 0.0
        %2154 = vmatpush1.msra.mxu0 0.0
        %2155 = vmatprep.subr.mxu0 0.0
        %2156 = vmatpush1.msra.mxu0 0.0
        %2157 = vmatprep.subr.mxu0 0.0
        %2158 = vmatpush1.msra.mxu0 0.0
        %2159 = vmatprep.subr.mxu0 0.0
        %2160 = vmatpush1.msra.mxu0 0.0
        %2161 = vmatprep.subr.mxu0 0.0
        %2162 = vmatpush1.msra.mxu0 0.0
        %2163 = vmatprep.subr.mxu0 0.0
        %2164 = vmatpush1.msra.mxu0 0.0
        %2165 = vmatprep.subr.mxu0 0.0
        %2166 = vmatpush1.msra.mxu0 0.0
        %2167 = vmatprep.subr.mxu0 0.0
        %2168 = vmatpush1.msra.mxu0 0.0
        %2169 = vmatprep.subr.mxu0 0.0
        %2170 = vmatpush1.msra.mxu0 0.0
        %2171 = vmatprep.subr.mxu0 0.0
        %2172 = vmatpush1.msra.mxu0 0.0
        %2173 = vmatprep.subr.mxu0 0.0
        %2174 = vmatpush1.msra.mxu0 0.0
        %2175 = vmatprep.subr.mxu0 0.0
        %2176 = vmatpush1.msra.mxu0 0.0
        %2177 = vmatprep.subr.mxu0 0.0
        %2178 = vmatpush1.msra.mxu0 0.0
        %2179 = vmatprep.subr.mxu0 0.0
        %2180 = vmatpush1.msra.mxu0 0.0
        %2181 = vmatprep.subr.mxu0 0.0
        %2182 = vmatpush1.msra.mxu0 0.0
        %2183 = vmatprep.subr.mxu0 0.0
        %2184 = vmatpush1.msra.mxu0 0.0
        %2185 = vmatprep.subr.mxu0 0.0
        %2186 = vmatpush1.msra.mxu0 0.0
        %2187 = vmatprep.subr.mxu0 0.0
        %2188 = vmatpush1.msra.mxu0 0.0
        %2189 = vmatprep.subr.mxu0 0.0
        %2190 = vmatpush1.msra.mxu0 0.0
        %2191 = vmatprep.subr.mxu0 0.0
        %2192 = vmatpush1.msra.mxu0 0.0
        %2193 = vmatprep.subr.mxu0 0.0
        %2194 = vmatpush1.msra.mxu0 0.0
        %2195 = vmatprep.subr.mxu0 0.0
        %2196 = vmatpush1.msra.mxu0 0.0
        %2197 = vmatprep.subr.mxu0 0.0
        %2198 = vmatpush1.msra.mxu0 0.0
        %2199 = vmatprep.subr.mxu0 0.0
        %2200 = vmatpush1.msra.mxu0 0.0
        %2201 = vmatprep.subr.mxu0 0.0
        %2202 = vmatpush1.msra.mxu0 0.0
        %2203 = vmatprep.subr.mxu0 0.0
        %2204 = vmatpush1.msra.mxu0 0.0
        %2205 = vmatprep.subr.mxu0 0.0
        %2206 = vmatpush1.msra.mxu0 0.0
        %2207 = vmatprep.subr.mxu0 0.0
        %2208 = vmatpush1.msra.mxu0 0.0
        %2209 = vmatprep.mubr.f32.mxu0 0.0
        %2210 = vmatmul.mubr.f32.gmra.mrb[0].mxu0 %v2045
        %v2211 = vpop.f32.mrb[0].mxu0
        %v2212 = vadd.f32 0.0, %v2211
        %v2213 = vpop.f32.mrb[0].mxu0
        %v2214 = vadd.f32 0.0, %v2213
        %2215 = vmatprep.mubr.f32.mxu0 0.0
        %2216 = vmatmul.mubr.f32.gmra.mrb[0].mxu0 %v2048
        %v2217 = vpop.f32.mrb[0].mxu0
        %v2218 = vadd.f32 0.0, %v2217
        %v2219 = vpop.f32.mrb[0].mxu0
        %v2220 = vadd.f32 0.0, %v2219
        %2221 = vdwg.mxu0
        %2222 = vmatprep.subr.mxu0 %v1894
        %2223 = vmatpush1.msra.mxu0 %v1893
        %2224 = vmatprep.subr.mxu0 %v1896
        %2225 = vmatpush1.msra.mxu0 %v1895
        %2226 = vmatprep.subr.mxu0 0.0
        %2227 = vmatpush1.msra.mxu0 0.0
        %2228 = vmatprep.subr.mxu0 0.0
        %2229 = vmatpush1.msra.mxu0 0.0
        %2230 = vmatprep.subr.mxu0 0.0
        %2231 = vmatpush1.msra.mxu0 0.0
        %2232 = vmatprep.subr.mxu0 0.0
        %2233 = vmatpush1.msra.mxu0 0.0
        %2234 = vmatprep.subr.mxu0 0.0
        %2235 = vmatpush1.msra.mxu0 0.0
        %2236 = vmatprep.subr.mxu0 0.0
        %2237 = vmatpush1.msra.mxu0 0.0
        %2238 = vmatprep.subr.mxu0 0.0
        %2239 = vmatpush1.msra.mxu0 0.0
        %2240 = vmatprep.subr.mxu0 0.0
        %2241 = vmatpush1.msra.mxu0 0.0
        %2242 = vmatprep.subr.mxu0 0.0
        %2243 = vmatpush1.msra.mxu0 0.0
        %2244 = vmatprep.subr.mxu0 0.0
        %2245 = vmatpush1.msra.mxu0 0.0
        %2246 = vmatprep.subr.mxu0 0.0
        %2247 = vmatpush1.msra.mxu0 0.0
        %2248 = vmatprep.subr.mxu0 0.0
        %2249 = vmatpush1.msra.mxu0 0.0
        %2250 = vmatprep.subr.mxu0 0.0
        %2251 = vmatpush1.msra.mxu0 0.0
        %2252 = vmatprep.subr.mxu0 0.0
        %2253 = vmatpush1.msra.mxu0 0.0
        %2254 = vmatprep.subr.mxu0 0.0
        %2255 = vmatpush1.msra.mxu0 0.0
        %2256 = vmatprep.subr.mxu0 0.0
        %2257 = vmatpush1.msra.mxu0 0.0
        %2258 = vmatprep.subr.mxu0 0.0
        %2259 = vmatpush1.msra.mxu0 0.0
        %2260 = vmatprep.subr.mxu0 0.0
        %2261 = vmatpush1.msra.mxu0 0.0
        %2262 = vmatprep.subr.mxu0 0.0
        %2263 = vmatpush1.msra.mxu0 0.0
        %2264 = vmatprep.subr.mxu0 0.0
        %2265 = vmatpush1.msra.mxu0 0.0
        %2266 = vmatprep.subr.mxu0 0.0
        %2267 = vmatpush1.msra.mxu0 0.0
        %2268 = vmatprep.subr.mxu0 0.0
        %2269 = vmatpush1.msra.mxu0 0.0
        %2270 = vmatprep.subr.mxu0 0.0
        %2271 = vmatpush1.msra.mxu0 0.0
        %2272 = vmatprep.subr.mxu0 0.0
        %2273 = vmatpush1.msra.mxu0 0.0
        %2274 = vmatprep.subr.mxu0 0.0
        %2275 = vmatpush1.msra.mxu0 0.0
        %2276 = vmatprep.subr.mxu0 0.0
        %2277 = vmatpush1.msra.mxu0 0.0
        %2278 = vmatprep.subr.mxu0 0.0
        %2279 = vmatpush1.msra.mxu0 0.0
        %2280 = vmatprep.subr.mxu0 0.0
        %2281 = vmatpush1.msra.mxu0 0.0
        %2282 = vmatprep.subr.mxu0 0.0
        %2283 = vmatpush1.msra.mxu0 0.0
        %2284 = vmatprep.subr.mxu0 0.0
        %2285 = vmatpush1.msra.mxu0 0.0
        %2286 = vmatprep.mubr.f32.mxu0 0.0
        %2287 = vmatmul.mubr.f32.gmra.mrb[0].mxu0 %v1930
        %v2288 = vpop.f32.mrb[0].mxu0
        %v2289 = vadd.f32 %v2212, %v2288
        %v2290 = vpop.f32.mrb[0].mxu0
        %v2291 = vadd.f32 %v2214, %v2290
        %2292 = vmatprep.mubr.f32.mxu0 0.0
        %2293 = vmatmul.mubr.f32.gmra.mrb[0].mxu0 %v1933
        %v2294 = vpop.f32.mrb[0].mxu0
        %v2295 = vadd.f32 %v2218, %v2294
        %v2296 = vpop.f32.mrb[0].mxu0
        %v2297 = vadd.f32 %v2220, %v2296
        %2298 = vdwg.mxu0
        %2300 = vset.pattern.permute.xlu0 0
        %2301 = vperm.xlu0 %2300, %v1471
        %v2302 = vpop.permute.xlu0 %2301
        %2305 = vset.pattern.permute.xlu0 0
        %2306 = vperm.xlu0 %2305, %v1472
        %v2307 = vpop.permute.xlu0 %2306
        %v2309 = vadd.f32 %v2289, %v2302
        %v2310 = vadd.f32 %v2291, %v2302
        %v2311 = vadd.f32 %v2295, %v2307
        %v2312 = vadd.f32 %v2297, %v2307
        %vm2313 = vcmp.gt.f32.partialorder %v2141, 0.01
        %vm2314 = vcmp.gt.f32.partialorder %v2142, 0.01
        %vm2315 = vcmp.gt.f32.partialorder %v2143, 0.01
        %vm2316 = vcmp.gt.f32.partialorder %v2144, 0.01
        %v2317 = vsub.f32 %v2141, 0.01
        %v2318 = vsub.f32 %v2142, 0.01
        %v2319 = vsub.f32 %v2143, 0.01
        %v2320 = vsub.f32 %v2144, 0.01
        %vm2321 = vcmp.lt.f32.partialorder %v2141, -0.01
        %vm2322 = vcmp.lt.f32.partialorder %v2142, -0.01
        %vm2323 = vcmp.lt.f32.partialorder %v2143, -0.01
        %vm2324 = vcmp.lt.f32.partialorder %v2144, -0.01
        %v2325 = vadd.f32 %v2141, 0.01
        %v2326 = vadd.f32 %v2142, 0.01
        %v2327 = vadd.f32 %v2143, 0.01
        %v2328 = vadd.f32 %v2144, 0.01
        %v2329 = vsel %vm2321, %v2325, 0.0
        %v2330 = vsel %vm2322, %v2326, 0.0
        %v2331 = vsel %vm2323, %v2327, 0.0
        %v2332 = vsel %vm2324, %v2328, 0.0
        %v2333 = vsel %vm2313, %v2317, %v2329
        %v2334 = vsel %vm2314, %v2318, %v2330
        %v2335 = vsel %vm2315, %v2319, %v2331
        %v2336 = vsel %vm2316, %v2320, %v2332
        %vm2337 = vcmp.gt.f32.partialorder %v2309, 0.01
        %vm2338 = vcmp.gt.f32.partialorder %v2310, 0.01
        %vm2339 = vcmp.gt.f32.partialorder %v2311, 0.01
        %vm2340 = vcmp.gt.f32.partialorder %v2312, 0.01
        %v2341 = vsub.f32 %v2309, 0.01
        %v2342 = vsub.f32 %v2310, 0.01
        %v2343 = vsub.f32 %v2311, 0.01
        %v2344 = vsub.f32 %v2312, 0.01
        %vm2345 = vcmp.lt.f32.partialorder %v2309, -0.01
        %vm2346 = vcmp.lt.f32.partialorder %v2310, -0.01
        %vm2347 = vcmp.lt.f32.partialorder %v2311, -0.01
        %vm2348 = vcmp.lt.f32.partialorder %v2312, -0.01
        %v2349 = vadd.f32 %v2309, 0.01
        %v2350 = vadd.f32 %v2310, 0.01
        %v2351 = vadd.f32 %v2311, 0.01
        %v2352 = vadd.f32 %v2312, 0.01
        %v2353 = vsel %vm2345, %v2349, 0.0
        %v2354 = vsel %vm2346, %v2350, 0.0
        %v2355 = vsel %vm2347, %v2351, 0.0
        %v2356 = vsel %vm2348, %v2352, 0.0
        %v2357 = vsel %vm2337, %v2341, %v2353
        %v2358 = vsel %vm2338, %v2342, %v2354
        %v2359 = vsel %vm2339, %v2343, %v2355
        %v2360 = vsel %vm2340, %v2344, %v2356
        %v2361 = vmul.f32 %v1425, %v2333
        %v2362 = vmul.f32 %v1426, %v2334
        %v2363 = vmul.f32 %v1427, %v2335
        %v2364 = vmul.f32 %v1428, %v2336
        %v2365 = vmul.f32 %v1449, %v2357
        %v2366 = vmul.f32 %v1450, %v2358
        %v2367 = vmul.f32 %v1451, %v2359
        %v2368 = vmul.f32 %v1452, %v2360
        %v2369 = vsub.f32 %v2361, %v2365
        %v2370 = vsub.f32 %v2362, %v2366
        %v2371 = vsub.f32 %v2363, %v2367
        %v2372 = vsub.f32 %v2364, %v2368
        %2373 = vst [vmem:[%s522] sm:$0xff] %v2369
        %2374 = vst [vmem:[%s522 + $0x8] sm:$0xff] %v2370
        %2375 = vst [vmem:[%s522 + $0x10] sm:$0xff] %v2371
        %2376 = vst [vmem:[%s522 + $0x18] sm:$0xff] %v2372
        %v2377 = vmul.f32 %v1425, %v2357
        %v2378 = vmul.f32 %v1426, %v2358
        %v2379 = vmul.f32 %v1427, %v2359
        %v2380 = vmul.f32 %v1428, %v2360
        %v2381 = vmul.f32 %v1449, %v2333
        %v2382 = vmul.f32 %v1450, %v2334
        %v2383 = vmul.f32 %v1451, %v2335
        %v2384 = vmul.f32 %v1452, %v2336
        %v2385 = vadd.f32 %v2377, %v2381
        %v2386 = vadd.f32 %v2378, %v2382
        %v2387 = vadd.f32 %v2379, %v2383
        %v2388 = vadd.f32 %v2380, %v2384
        %s2389 = scalar_lea.vmem %s522, 32 [#allocation11]
        %2390 = vst [vmem:[%s2389] sm:$0xff] %v2385
        %2391 = vst [vmem:[%s2389 + $0x8] sm:$0xff] %v2386
        %2392 = vst [vmem:[%s2389 + $0x10] sm:$0xff] %v2387
        %2393 = vst [vmem:[%s2389 + $0x18] sm:$0xff] %v2388
        %s2394 = sand.u32 %s275, 1
        %s2395 = scalar_lea.sflag [#allocation5], %s2394
        %s2396 = sand.u32 %s275, 1
        %s2397 = smul.addr %s2396, 64
        %s2398 = scalar_lea.vmem [#allocation11], %s2397
        // Predicated region
        $region100: #{tpu_custom_call.1} parent=78 // pred_check
          %p2399 = pneg %p285
        $region101: #{tpu_custom_call.1} parent=78 // pred_check_branch
          %2401 = sbr.rel (%p2399) target = $region103
        $region102: #{tpu_custom_call.1} parent=78 // pred_region
          #allocation15 [shape = 'u32[6]{0}', space=smem, size = 0x18, scoped, tag = 'DMA stride descriptor']
          %s2402 = smul.u32 2, %s34
          %s2404 = ssub.s32 1024, 1024
          %2405 = vsyncadd %s2395, %s2404
          %s2406 = smul.addr %s33, 4
          %s2407 = sadd.s32 %s2402, %s2406
          %s2408 = smul.addr %s2407, 128
          %s2409 = scalar_lea.hbm %s10, %s2408
          %s2411 = sshll.u32 1, 14
          %s2412 = sxor.u32 4294967295, %s2411
          %s2415 = sshll.u32 7, 18
          %s2416 = sxor.u32 4294967295, %s2415
          %s2417 = sand.u32 0, %s2416
          %s2419 = sor.u32 %s2417, 0
          %s2421 = sshll.u32 3, 24
          %s2422 = sxor.u32 4294967295, %s2421
          %s2423 = sand.u32 %s2419, %s2422
          %s2425 = sor.u32 %s2423, 0
          %s2426 = sshll.u32 %s2398, 4
          %s2427 = int_to_ptr.vmem [resolvable:$true] %s2426
          %2433 = sst [smem:[#allocation15]] 512
          %s2434 = scalar_lea.smem [#allocation15], 1
          %2435 = sst [smem:[%s2434]] 1024
          %s2436 = scalar_lea.smem [#allocation15], 2
          %2437 = sst [smem:[%s2436]] 2
          %s2438 = scalar_lea.smem [#allocation15], 3
          %2439 = sst [smem:[%s2438]] 256
          %s2440 = scalar_lea.smem [#allocation15], 4
          %2441 = sst [smem:[%s2440]] 256
          %s2442 = scalar_lea.smem [#allocation15], 5
          %2443 = sst [smem:[%s2442]] 16
          %2445 = dma.general %s2427, 1024, %s2409, %s2395, [#allocation14], [#allocation15], %s2425, 0
        $region103: #{tpu_custom_call.1} parent=78 // pred_fallthru
          _
      $region79: #{tpu_custom_call.1} parent=5 // pred_fallthru
        _
      %p2446 = scmp.le.s32.totalorder 2, %s24
      // Predicated region
      $region104: #{tpu_custom_call.1} parent=5 // pred_check
        %p2447 = pneg %p2446
      $region105: #{tpu_custom_call.1} parent=5 // pred_check_branch
        %2449 = sbr.rel (%p2447) target = $region107
      $region106: #{tpu_custom_call.1} parent=5 // pred_region
        %s2450 = ssub.s32 %s24, 2
        // Predicated region
        $region108: #{tpu_custom_call.1} parent=106 // pred_check
          %p2451 = pneg %p291
        $region109: #{tpu_custom_call.1} parent=106 // pred_check_branch
          %2453 = sbr.rel (%p2451) target = $region111
        $region110: #{tpu_custom_call.1} parent=106 // pred_region
          %s2454 = sand.u32 %s276, 1
          %s2455 = scalar_lea.sflag [#allocation5], %s2454
          %s2456 = sand.u32 %s276, 1
          %s2457 = smul.addr %s2456, 64
          %s2458 = scalar_lea.vmem [#allocation11], %s2457
          %2459 = dma.done %s2455, 1024
        $region111: #{tpu_custom_call.1} parent=106 // pred_fallthru
          _
      $region107: #{tpu_custom_call.1} parent=5 // pred_fallthru
        _
    $region6: #{tpu_custom_call.1} parent=1 // loop_footer
      %s28 = sadd.s32 1, %s24
    $region7: #{tpu_custom_call.1} parent=1 // loop_footer_branch
      %23 = sbr.rel target = $region3
    $region8: #{tpu_custom_call.1} parent=1 // loop_exit
      _
    %2460 = vsyncpa [#allocation4], 1
    %s2461 = scalar_lea.sflag [#allocation4], 1
    %2462 = vsyncpa %s2461, 1
    %2463 = vsyncpa [#allocation7], 1
    %2464 = vsyncpa [#allocation10], 1
    %2465 = vsyncpa [#allocation5], 1
    %s2466 = scalar_lea.sflag [#allocation5], 1
    %2467 = vsyncpa %s2466, 1

</llo_original>
